<compile_context>
chip_gen: v7x
topology: tpu7x:2x2x1
jax: 0.10.0
libtpu: 0.0.40
codegen_flags: <defaults>
</compile_context>

<pallas_src>
from functools import partial

import numpy as np
import jax
import jax.numpy as jnp
from jax.experimental import pallas as pl
from jax.experimental.pallas import tpu as pltpu

N_PAD = 128   # boxes padded to one full lane group (hard cap on box count)
CHUNK = 8     # trials per sublane chunk inside the kernel


# ----------------------------------------------------------------------------
# Kernel: all trials in ONE grid step, trials on sublanes / boxes on lanes.
#   params_ref     : f32 (T_PAD, 8)   VMEM  cols = [l, t, r, b, new_w, new_h, valid, 0]
#   boxes_ref      : f32 (8, 128)     VMEM  rows 0-3 = x1,y1,x2,y2, row 4 = lane_valid
#   out_boxes_ref  : f32 (4, T_PAD, 128)    shifted + clamped x1,y1,x2,y2
#   out_within_ref : f32 (T_PAD, 128)       center-within-crop mask (1.0 / 0.0)
#   out_iou_ref    : f32 (T_PAD, 128)       IoU vs crop window (-1 where not within)
# ----------------------------------------------------------------------------
def _trials_kernel(params_ref, boxes_ref, out_boxes_ref, out_within_ref, out_iou_ref):
    # Box quantities (lane axis) — hoisted once, reused by every trial chunk.
    bx1 = boxes_ref[0:1, :]
    by1 = boxes_ref[1:2, :]
    bx2 = boxes_ref[2:3, :]
    by2 = boxes_ref[3:4, :]
    lane_valid = boxes_ref[4:5, :] > 0.5
    cx = 0.5 * (bx1 + bx2)
    cy = 0.5 * (by1 + by2)
    area_b = (bx2 - bx1) * (by2 - by1)

    t_pad = params_ref.shape[0]
    n_chunks = t_pad // CHUNK
    # Static unrolled loop over sublane chunks; nothing is carried across
    # chunks so each chunk's ~15 (8,128) temporaries die before the next.
    for c in range(n_chunks):
        row = pl.ds(c * CHUNK, CHUNK)
        p = params_ref[row, :]                       # (8, 8)
        left = p[:, 0:1]                             # (8, 1) columns, broadcast on lanes
        top = p[:, 1:2]
        right = p[:, 2:3]
        bottom = p[:, 3:4]
        new_w = p[:, 4:5]
        new_h = p[:, 5:6]
        valid = p[:, 6:7] > 0.5

        # Center-within-crop mask (trial x box) — (8, 128).
        within = ((left < cx) & (cx < right) & (top < cy) & (cy < bottom)
                  & lane_valid & valid)

        # IoU of each box against the crop window [left, top, right, bottom].
        ix1 = jnp.maximum(bx1, left)
        iy1 = jnp.maximum(by1, top)
        ix2 = jnp.minimum(bx2, right)
        iy2 = jnp.minimum(by2, bottom)
        inter = jnp.maximum(ix2 - ix1, 0.0) * jnp.maximum(iy2 - iy1, 0.0)
        area_c = (right - left) * (bottom - top)
        denom = jnp.maximum(area_b + area_c - inter, 1e-6)   # guard invalid trials (denom==0)
        iou = jnp.where(within, inter / denom, -1.0)          # exact divide

        # Shift by (left, top) and clamp to the new crop extent.
        nb_x1 = jnp.clip(bx1 - left, 0.0, new_w)
        nb_y1 = jnp.clip(by1 - top, 0.0, new_h)
        nb_x2 = jnp.clip(bx2 - left, 0.0, new_w)
        nb_y2 = jnp.clip(by2 - top, 0.0, new_h)

        # Lane-dense unmasked (8,128) stores, one per quantity.
        out_boxes_ref[0, row, :] = nb_x1
        out_boxes_ref[1, row, :] = nb_y1
        out_boxes_ref[2, row, :] = nb_x2
        out_boxes_ref[3, row, :] = nb_y2
        out_within_ref[row, :] = within.astype(jnp.float32)
        out_iou_ref[row, :] = iou


def _eval_trials(params, boxes_pad):
    """params: f32 (T_PAD, 8); boxes_pad: f32 (8, 128)."""
    t_pad = params.shape[0]
    return pl.pallas_call(
        _trials_kernel,
        out_shape=(
            jax.ShapeDtypeStruct((4, t_pad, N_PAD), jnp.float32),
            jax.ShapeDtypeStruct((t_pad, N_PAD), jnp.float32),
            jax.ShapeDtypeStruct((t_pad, N_PAD), jnp.float32),
        ),
        grid_spec=pltpu.PrefetchScalarGridSpec(
            num_scalar_prefetch=0,
            grid=(1,),
            in_specs=[
                pl.BlockSpec((t_pad, 8), lambda i: (0, 0)),
                pl.BlockSpec((8, N_PAD), lambda i: (0, 0)),
            ],
            out_specs=[
                pl.BlockSpec((4, t_pad, N_PAD), lambda i: (0, 0, 0)),
                pl.BlockSpec((t_pad, N_PAD), lambda i: (0, 0)),
                pl.BlockSpec((t_pad, N_PAD), lambda i: (0, 0)),
            ],
        ),
        compiler_params=pltpu.CompilerParams(
            dimension_semantics=("arbitrary",)),
    )(params, boxes_pad)


# ----------------------------------------------------------------------------
# One full rejection-sampling round on device: RNG, candidate-window
# construction, Pallas trial evaluation, acceptance reduction and the gather
# of the accepted trial.  The host sees only a tiny result tuple.
# ----------------------------------------------------------------------------
@partial(jax.jit, static_argnames=(
    "orig_w", "orig_h", "min_scale", "max_scale",
    "min_aspect_ratio", "max_aspect_ratio", "trials", "options"))
def _sample_round(key, boxes_pad, *, orig_w, orig_h, min_scale, max_scale,
                  min_aspect_ratio, max_aspect_ratio, trials, options):
    key, k_idx, k_u = jax.random.split(key, 3)
    options_arr = jnp.asarray(options, dtype=jnp.float32)
    idx = jax.random.randint(k_idx, (), 0, len(options))
    min_overlap = options_arr[idx]
    u = jax.random.uniform(k_u, (trials, 4), dtype=jnp.float32)

    # Candidate crop windows (was a host-side Python loop).
    new_w = jnp.floor(orig_w * (min_scale + (max_scale - min_scale) * u[:, 0]))
    new_h = jnp.floor(orig_h * (min_scale + (max_scale - min_scale) * u[:, 1]))
    aspect = new_w / jnp.maximum(new_h, 1.0)
    left = jnp.floor((orig_w - new_w) * u[:, 2])
    top = jnp.floor((orig_h - new_h) * u[:, 3])
    right = left + new_w
    bottom = top + new_h
    valid = ((new_w > 0) & (new_h > 0)
             & (aspect >= min_aspect_ratio) & (aspect <= max_aspect_ratio)
             & (left < right) & (top < bottom))

    t_pad = ((trials + CHUNK - 1) // CHUNK) * CHUNK
    cols = jnp.stack(
        [left, top, right, bottom, new_w, new_h,
         valid.astype(jnp.float32), jnp.zeros_like(left)], axis=1)      # (trials, 8)
    params = jnp.zeros((t_pad, 8), jnp.float32).at[:trials].set(cols)

    out_boxes, out_within, out_iou = _eval_trials(params, boxes_pad)

    # Acceptance reduction + first-accept selection, all on device.
    max_iou = jnp.max(out_iou, axis=-1)                 # (t_pad,)
    any_within = jnp.max(out_within, axis=-1) > 0.5     # (t_pad,)
    valid_pad = jnp.zeros((t_pad,), jnp.bool_).at[:trials].set(valid)
    accept = valid_pad & any_within & (max_iou >= min_overlap)
    accepted = jnp.any(accept)
    first = jnp.argmax(accept.astype(jnp.int32))        # first accepted trial

    sel_params = params[first]                          # (8,)
    sel_within = out_within[first]                      # (128,)
    sel_boxes = out_boxes[:, first, :]                  # (4, 128)
    return key, (min_overlap, accepted, sel_params, sel_within, sel_boxes)


# ----------------------------------------------------------------------------
# Module wrapper replicating RandomIoUCrop.forward semantics
# ----------------------------------------------------------------------------
class RandomIoUCropPallas:
    def __init__(self, min_scale=0.3, max_scale=1.0, min_aspect_ratio=0.5,
                 max_aspect_ratio=2.0, sampler_options=None, trials=40):
        self.min_scale = float(min_scale)
        self.max_scale = float(max_scale)
        self.min_aspect_ratio = float(min_aspect_ratio)
        self.max_aspect_ratio = float(max_aspect_ratio)
        if sampler_options is None:
            sampler_options = [0.0, 0.1, 0.3, 0.5, 0.7, 0.9, 1.0]
        self.options = tuple(float(o) for o in sampler_options)
        self.trials = int(trials)

    def __call__(self, image, target, key):
        if target is None:
            raise ValueError("The targets can't be None for this transform.")
        if image.ndim not in (2, 3):
            raise ValueError(
                "image should be 2/3 dimensional. Got {} dimensions.".format(image.ndim))
        if image.ndim == 2:
            image = image[None, :, :]
        orig_h, orig_w = int(image.shape[-2]), int(image.shape[-1])

        boxes_np = np.asarray(target["boxes"], dtype=np.float32)  # (N, 4)
        labels_np = np.asarray(target["labels"])
        n = boxes_np.shape[0]
        if n > N_PAD:
            raise ValueError(f"RandomIoUCropPallas supports at most {N_PAD} boxes, got {n}.")
        boxes_pad_np = np.zeros((8, N_PAD), dtype=np.float32)
        boxes_pad_np[:4, :n] = boxes_np.T
        boxes_pad_np[4, :n] = 1.0                   # lane-valid mask
        boxes_pad = jnp.asarray(boxes_pad_np)

        # Reference uses `while True`; bounded here purely as a safety net.
        for _outer in range(1000):
            # One jitted dispatch + ONE blocking host sync per round.
            key, res = _sample_round(
                key, boxes_pad,
                orig_w=orig_w, orig_h=orig_h,
                min_scale=self.min_scale, max_scale=self.max_scale,
                min_aspect_ratio=self.min_aspect_ratio,
                max_aspect_ratio=self.max_aspect_ratio,
                trials=self.trials, options=self.options)
            min_overlap, accepted, sel_params, sel_within, sel_boxes = jax.device_get(res)

            if float(min_overlap) >= 1.0:
                return image, target
            if not bool(accepted):
                continue

            left = int(sel_params[0]); top = int(sel_params[1])
            new_w = int(sel_params[4]); new_h = int(sel_params[5])

            # TODO(synk): dynamic-shape boolean filtering of boxes/labels has no
            # static-shape Pallas equivalent; done here in host-side NumPy glue.
            within = sel_within[:n] > 0.5
            new_boxes_np = np.asarray(sel_boxes)[0:4, :n].T  # (N, 4) shifted + clamped
            boxes_out = jnp.asarray(new_boxes_np[within])
            labels_out = jnp.asarray(labels_np[within])

            # Image crop: plain device slice (pure memcpy); a Pallas kernel here
            # only adds recompiles and extra HBM traffic.
            image_out = image[:, top:top + new_h, left:left + new_w]

            new_target = dict(target)
            new_target["boxes"] = boxes_out
            new_target["labels"] = labels_out
            return image_out, new_target
        raise RuntimeError("RandomIoUCrop: no valid crop found")


if __name__ == "__main__":
    key = jax.random.PRNGKey(0)
    kimg, kbox, krun = jax.random.split(key, 3)

    C, H, W = 3, 16, 16
    image = jax.random.normal(kimg, (C, H, W), dtype=jnp.float32)

    n_boxes = 8
    k1, k2, k3, k4 = jax.random.split(kbox, 4)
    x1 = jax.random.uniform(k1, (n_boxes,), minval=0.0, maxval=10.0)
    y1 = jax.random.uniform(k2, (n_boxes,), minval=0.0, maxval=10.0)
    bw = jax.random.uniform(k3, (n_boxes,), minval=2.0, maxval=6.0)
    bh = jax.random.uniform(k4, (n_boxes,), minval=2.0, maxval=6.0)
    boxes = jnp.stack(
        [x1, y1, jnp.minimum(x1 + bw, float(W)), jnp.minimum(y1 + bh, float(H))], axis=1)
    labels = jnp.arange(n_boxes, dtype=jnp.int32)
    target = {"boxes": boxes, "labels": labels}

    # Direct smoke test of the single-launch, sublane-vectorized trial kernel.
    trials = 40
    t_pad = ((trials + CHUNK - 1) // CHUNK) * CHUNK
    params_np = np.zeros((t_pad, 8), dtype=np.float32)
    params_np[0, :7] = [2, 2, 14, 14, 12, 12, 1]    # one valid crop window
    params_np[1, :7] = [0, 0, 8, 8, 8, 8, 1]        # another valid window
    boxes_pad_np = np.zeros((8, N_PAD), dtype=np.float32)
    boxes_pad_np[:4, :n_boxes] = np.asarray(boxes).T
    boxes_pad_np[4, :n_boxes] = 1.0
    smoke = _eval_trials(jnp.asarray(params_np), jnp.asarray(boxes_pad_np))
    jax.block_until_ready(smoke)

    # Full transform: one jitted round (RNG + window gen + Pallas kernel +
    # acceptance reduction) and one host sync per rejection round.
    transform = RandomIoUCropPallas(trials=trials)
    out_image, out_target = transform(image, target, krun)
    jax.block_until_ready(out_image)
    jax.block_until_ready(out_target["boxes"])
    jax.block_until_ready(out_target["labels"])

    print("KERNEL_OK")
</pallas_src>

<mosaic_0001>
module attributes {stable_mosaic.version = 11 : i64} {
  func.func @_trials_kernel(%arg0: i32, %arg1: memref<40x8xf32, #tpu.memory_space<vmem>>, %arg2: memref<8x128xf32, #tpu.memory_space<vmem>>, %arg3: memref<4x40x128xf32, #tpu.memory_space<vmem>>, %arg4: memref<40x128xf32, #tpu.memory_space<vmem>>, %arg5: memref<40x128xf32, #tpu.memory_space<vmem>>) attributes {dimension_semantics = [#tpu.dimension_semantics<arbitrary>], iteration_bounds = array<i64: 1>, scalar_prefetch = 0 : i64, scratch_operands = 0 : i64, tpu.core_type = #tpu.core_type<tc>, window_params = [{pipeline_mode = #tpu.pipeline_mode<synchronous>, transform_indices = @transform_0, window_bounds = array<i64: 40, 8>}, {pipeline_mode = #tpu.pipeline_mode<synchronous>, transform_indices = @transform_1, window_bounds = array<i64: 8, 128>}, {pipeline_mode = #tpu.pipeline_mode<synchronous>, transform_indices = @transform_2, window_bounds = array<i64: 4, 40, 128>}, {pipeline_mode = #tpu.pipeline_mode<synchronous>, transform_indices = @transform_3, window_bounds = array<i64: 40, 128>}, {pipeline_mode = #tpu.pipeline_mode<synchronous>, transform_indices = @transform_4, window_bounds = array<i64: 40, 128>}]} {
    %c0 = arith.constant 0 : index
    %c0_0 = arith.constant 0 : index
    %0 = vector.load %arg2[%c0, %c0_0] : memref<8x128xf32, #tpu.memory_space<vmem>>, vector<1x128xf32>
    %c1 = arith.constant 1 : index
    %c0_1 = arith.constant 0 : index
    %1 = vector.load %arg2[%c1, %c0_1] : memref<8x128xf32, #tpu.memory_space<vmem>>, vector<1x128xf32>
    %c2 = arith.constant 2 : index
    %c0_2 = arith.constant 0 : index
    %2 = vector.load %arg2[%c2, %c0_2] : memref<8x128xf32, #tpu.memory_space<vmem>>, vector<1x128xf32>
    %c3 = arith.constant 3 : index
    %c0_3 = arith.constant 0 : index
    %3 = vector.load %arg2[%c3, %c0_3] : memref<8x128xf32, #tpu.memory_space<vmem>>, vector<1x128xf32>
    %c4 = arith.constant 4 : index
    %c0_4 = arith.constant 0 : index
    %4 = vector.load %arg2[%c4, %c0_4] : memref<8x128xf32, #tpu.memory_space<vmem>>, vector<1x128xf32>
    %cst = arith.constant 5.000000e-01 : f32
    %5 = vector.broadcast %cst : f32 to vector<1x128xf32>
    %6 = arith.cmpf ogt, %4, %5 : vector<1x128xf32>
    %7 = arith.addf %0, %2 : vector<1x128xf32>
    %cst_5 = arith.constant 5.000000e-01 : f32
    %8 = vector.broadcast %cst_5 : f32 to vector<1x128xf32>
    %9 = arith.mulf %8, %7 : vector<1x128xf32>
    %10 = arith.addf %1, %3 : vector<1x128xf32>
    %cst_6 = arith.constant 5.000000e-01 : f32
    %11 = vector.broadcast %cst_6 : f32 to vector<1x128xf32>
    %12 = arith.mulf %11, %10 : vector<1x128xf32>
    %13 = arith.subf %2, %0 : vector<1x128xf32>
    %14 = arith.subf %3, %1 : vector<1x128xf32>
    %15 = arith.mulf %13, %14 : vector<1x128xf32>
    %c0_7 = arith.constant 0 : index
    %c0_8 = arith.constant 0 : index
    %16 = vector.load %arg1[%c0_7, %c0_8] : memref<40x8xf32, #tpu.memory_space<vmem>>, vector<8x8xf32>
    %17 = vector.extract_strided_slice %16 {offsets = [0, 0], sizes = [8, 1], strides = [1, 1]} : vector<8x8xf32> to vector<8x1xf32>
    %18 = vector.extract_strided_slice %16 {offsets = [0, 1], sizes = [8, 1], strides = [1, 1]} : vector<8x8xf32> to vector<8x1xf32>
    %19 = vector.extract_strided_slice %16 {offsets = [0, 2], sizes = [8, 1], strides = [1, 1]} : vector<8x8xf32> to vector<8x1xf32>
    %20 = vector.extract_strided_slice %16 {offsets = [0, 3], sizes = [8, 1], strides = [1, 1]} : vector<8x8xf32> to vector<8x1xf32>
    %21 = vector.extract_strided_slice %16 {offsets = [0, 4], sizes = [8, 1], strides = [1, 1]} : vector<8x8xf32> to vector<8x1xf32>
    %22 = vector.extract_strided_slice %16 {offsets = [0, 5], sizes = [8, 1], strides = [1, 1]} : vector<8x8xf32> to vector<8x1xf32>
    %23 = vector.extract_strided_slice %16 {offsets = [0, 6], sizes = [8, 1], strides = [1, 1]} : vector<8x8xf32> to vector<8x1xf32>
    %cst_9 = arith.constant 5.000000e-01 : f32
    %24 = vector.broadcast %cst_9 : f32 to vector<8x1xf32>
    %25 = arith.cmpf ogt, %23, %24 : vector<8x1xf32>
    %26 = vector.broadcast %17 : vector<8x1xf32> to vector<8x128xf32>
    %27 = vector.broadcast %9 : vector<1x128xf32> to vector<8x128xf32>
    %28 = arith.cmpf olt, %26, %27 : vector<8x128xf32>
    %29 = vector.broadcast %9 : vector<1x128xf32> to vector<8x128xf32>
    %30 = vector.broadcast %19 : vector<8x1xf32> to vector<8x128xf32>
    %31 = arith.cmpf olt, %29, %30 : vector<8x128xf32>
    %32 = arith.andi %28, %31 : vector<8x128xi1>
    %33 = vector.broadcast %18 : vector<8x1xf32> to vector<8x128xf32>
    %34 = vector.broadcast %12 : vector<1x128xf32> to vector<8x128xf32>
    %35 = arith.cmpf olt, %33, %34 : vector<8x128xf32>
    %36 = arith.andi %32, %35 : vector<8x128xi1>
    %37 = vector.broadcast %12 : vector<1x128xf32> to vector<8x128xf32>
    %38 = vector.broadcast %20 : vector<8x1xf32> to vector<8x128xf32>
    %39 = arith.cmpf olt, %37, %38 : vector<8x128xf32>
    %40 = arith.andi %36, %39 : vector<8x128xi1>
    %41 = vector.broadcast %6 : vector<1x128xi1> to vector<8x128xi1>
    %42 = arith.andi %40, %41 : vector<8x128xi1>
    %43 = vector.broadcast %25 : vector<8x1xi1> to vector<8x128xi1>
    %44 = arith.andi %42, %43 : vector<8x128xi1>
    %45 = vector.broadcast %0 : vector<1x128xf32> to vector<8x128xf32>
    %46 = vector.broadcast %17 : vector<8x1xf32> to vector<8x128xf32>
    %47 = arith.maximumf %45, %46 : vector<8x128xf32>
    %48 = vector.broadcast %1 : vector<1x128xf32> to vector<8x128xf32>
    %49 = vector.broadcast %18 : vector<8x1xf32> to vector<8x128xf32>
    %50 = arith.maximumf %48, %49 : vector<8x128xf32>
    %51 = vector.broadcast %2 : vector<1x128xf32> to vector<8x128xf32>
    %52 = vector.broadcast %19 : vector<8x1xf32> to vector<8x128xf32>
    %53 = arith.minimumf %51, %52 : vector<8x128xf32>
    %54 = vector.broadcast %3 : vector<1x128xf32> to vector<8x128xf32>
    %55 = vector.broadcast %20 : vector<8x1xf32> to vector<8x128xf32>
    %56 = arith.minimumf %54, %55 : vector<8x128xf32>
    %57 = arith.subf %53, %47 : vector<8x128xf32>
    %cst_10 = arith.constant 0.000000e+00 : f32
    %58 = vector.broadcast %cst_10 : f32 to vector<8x128xf32>
    %59 = arith.maximumf %57, %58 : vector<8x128xf32>
    %60 = arith.subf %56, %50 : vector<8x128xf32>
    %cst_11 = arith.constant 0.000000e+00 : f32
    %61 = vector.broadcast %cst_11 : f32 to vector<8x128xf32>
    %62 = arith.maximumf %60, %61 : vector<8x128xf32>
    %63 = arith.mulf %59, %62 : vector<8x128xf32>
    %64 = arith.subf %19, %17 : vector<8x1xf32>
    %65 = arith.subf %20, %18 : vector<8x1xf32>
    %66 = arith.mulf %64, %65 : vector<8x1xf32>
    %67 = vector.broadcast %15 : vector<1x128xf32> to vector<8x128xf32>
    %68 = vector.broadcast %66 : vector<8x1xf32> to vector<8x128xf32>
    %69 = arith.addf %67, %68 : vector<8x128xf32>
    %70 = arith.subf %69, %63 : vector<8x128xf32>
    %cst_12 = arith.constant 9.99999997E-7 : f32
    %71 = vector.broadcast %cst_12 : f32 to vector<8x128xf32>
    %72 = arith.maximumf %70, %71 : vector<8x128xf32>
    %73 = arith.divf %63, %72 : vector<8x128xf32>
    %cst_13 = arith.constant -1.000000e+00 : f32
    %74 = vector.broadcast %cst_13 : f32 to vector<8x128xf32>
    %75 = arith.select %44, %73, %74 : vector<8x128xi1>, vector<8x128xf32>
    %76 = vector.broadcast %0 : vector<1x128xf32> to vector<8x128xf32>
    %77 = vector.broadcast %17 : vector<8x1xf32> to vector<8x128xf32>
    %78 = arith.subf %76, %77 : vector<8x128xf32>
    %cst_14 = arith.constant 0.000000e+00 : f32
    %79 = vector.broadcast %cst_14 : f32 to vector<8x128xf32>
    %80 = arith.maximumf %79, %78 : vector<8x128xf32>
    %81 = vector.broadcast %21 : vector<8x1xf32> to vector<8x128xf32>
    %82 = arith.minimumf %81, %80 : vector<8x128xf32>
    %83 = vector.broadcast %1 : vector<1x128xf32> to vector<8x128xf32>
    %84 = vector.broadcast %18 : vector<8x1xf32> to vector<8x128xf32>
    %85 = arith.subf %83, %84 : vector<8x128xf32>
    %cst_15 = arith.constant 0.000000e+00 : f32
    %86 = vector.broadcast %cst_15 : f32 to vector<8x128xf32>
    %87 = arith.maximumf %86, %85 : vector<8x128xf32>
    %88 = vector.broadcast %22 : vector<8x1xf32> to vector<8x128xf32>
    %89 = arith.minimumf %88, %87 : vector<8x128xf32>
    %90 = vector.broadcast %2 : vector<1x128xf32> to vector<8x128xf32>
    %91 = vector.broadcast %17 : vector<8x1xf32> to vector<8x128xf32>
    %92 = arith.subf %90, %91 : vector<8x128xf32>
    %cst_16 = arith.constant 0.000000e+00 : f32
    %93 = vector.broadcast %cst_16 : f32 to vector<8x128xf32>
    %94 = arith.maximumf %93, %92 : vector<8x128xf32>
    %95 = vector.broadcast %21 : vector<8x1xf32> to vector<8x128xf32>
    %96 = arith.minimumf %95, %94 : vector<8x128xf32>
    %97 = vector.broadcast %3 : vector<1x128xf32> to vector<8x128xf32>
    %98 = vector.broadcast %18 : vector<8x1xf32> to vector<8x128xf32>
    %99 = arith.subf %97, %98 : vector<8x128xf32>
    %cst_17 = arith.constant 0.000000e+00 : f32
    %100 = vector.broadcast %cst_17 : f32 to vector<8x128xf32>
    %101 = arith.maximumf %100, %99 : vector<8x128xf32>
    %102 = vector.broadcast %22 : vector<8x1xf32> to vector<8x128xf32>
    %103 = arith.minimumf %102, %101 : vector<8x128xf32>
    %c0_18 = arith.constant 0 : index
    %c0_19 = arith.constant 0 : index
    %c0_20 = arith.constant 0 : index
    %104 = vector.load %arg3[%c0_18, %c0_19, %c0_20] : memref<4x40x128xf32, #tpu.memory_space<vmem>>, vector<1x8x128xf32>
    %105 = vector.shape_cast %104 : vector<1x8x128xf32> to vector<8x128xf32>
    %106 = vector.shape_cast %82 : vector<8x128xf32> to vector<1x8x128xf32>
    tpu.vector_store %arg3[%c0_18, %c0_19, %c0_20], %106 {strides = array<i32>} : memref<4x40x128xf32, #tpu.memory_space<vmem>>, vector<1x8x128xf32>,
    %c1_21 = arith.constant 1 : index
    %c0_22 = arith.constant 0 : index
    %c0_23 = arith.constant 0 : index
    %107 = vector.load %arg3[%c1_21, %c0_22, %c0_23] : memref<4x40x128xf32, #tpu.memory_space<vmem>>, vector<1x8x128xf32>
    %108 = vector.shape_cast %107 : vector<1x8x128xf32> to vector<8x128xf32>
    %109 = vector.shape_cast %89 : vector<8x128xf32> to vector<1x8x128xf32>
    tpu.vector_store %arg3[%c1_21, %c0_22, %c0_23], %109 {strides = array<i32>} : memref<4x40x128xf32, #tpu.memory_space<vmem>>, vector<1x8x128xf32>,
    %c2_24 = arith.constant 2 : index
    %c0_25 = arith.constant 0 : index
    %c0_26 = arith.constant 0 : index
    %110 = vector.load %arg3[%c2_24, %c0_25, %c0_26] : memref<4x40x128xf32, #tpu.memory_space<vmem>>, vector<1x8x128xf32>
    %111 = vector.shape_cast %110 : vector<1x8x128xf32> to vector<8x128xf32>
    %112 = vector.shape_cast %96 : vector<8x128xf32> to vector<1x8x128xf32>
    tpu.vector_store %arg3[%c2_24, %c0_25, %c0_26], %112 {strides = array<i32>} : memref<4x40x128xf32, #tpu.memory_space<vmem>>, vector<1x8x128xf32>,
    %c3_27 = arith.constant 3 : index
    %c0_28 = arith.constant 0 : index
    %c0_29 = arith.constant 0 : index
    %113 = vector.load %arg3[%c3_27, %c0_28, %c0_29] : memref<4x40x128xf32, #tpu.memory_space<vmem>>, vector<1x8x128xf32>
    %114 = vector.shape_cast %113 : vector<1x8x128xf32> to vector<8x128xf32>
    %115 = vector.shape_cast %103 : vector<8x128xf32> to vector<1x8x128xf32>
    tpu.vector_store %arg3[%c3_27, %c0_28, %c0_29], %115 {strides = array<i32>} : memref<4x40x128xf32, #tpu.memory_space<vmem>>, vector<1x8x128xf32>,
    %116 = arith.extui %44 : vector<8x128xi1> to vector<8x128xi32>
    %117 = arith.sitofp %116 : vector<8x128xi32> to vector<8x128xf32>
    %c0_30 = arith.constant 0 : index
    %c0_31 = arith.constant 0 : index
    %118 = vector.load %arg4[%c0_30, %c0_31] : memref<40x128xf32, #tpu.memory_space<vmem>>, vector<8x128xf32>
    tpu.vector_store %arg4[%c0_30, %c0_31], %117 {strides = array<i32>} : memref<40x128xf32, #tpu.memory_space<vmem>>, vector<8x128xf32>,
    %c0_32 = arith.constant 0 : index
    %c0_33 = arith.constant 0 : index
    %119 = vector.load %arg5[%c0_32, %c0_33] : memref<40x128xf32, #tpu.memory_space<vmem>>, vector<8x128xf32>
    tpu.vector_store %arg5[%c0_32, %c0_33], %75 {strides = array<i32>} : memref<40x128xf32, #tpu.memory_space<vmem>>, vector<8x128xf32>,
    %c8 = arith.constant 8 : index
    %c0_34 = arith.constant 0 : index
    %120 = vector.load %arg1[%c8, %c0_34] : memref<40x8xf32, #tpu.memory_space<vmem>>, vector<8x8xf32>
    %121 = vector.extract_strided_slice %120 {offsets = [0, 0], sizes = [8, 1], strides = [1, 1]} : vector<8x8xf32> to vector<8x1xf32>
    %122 = vector.extract_strided_slice %120 {offsets = [0, 1], sizes = [8, 1], strides = [1, 1]} : vector<8x8xf32> to vector<8x1xf32>
    %123 = vector.extract_strided_slice %120 {offsets = [0, 2], sizes = [8, 1], strides = [1, 1]} : vector<8x8xf32> to vector<8x1xf32>
    %124 = vector.extract_strided_slice %120 {offsets = [0, 3], sizes = [8, 1], strides = [1, 1]} : vector<8x8xf32> to vector<8x1xf32>
    %125 = vector.extract_strided_slice %120 {offsets = [0, 4], sizes = [8, 1], strides = [1, 1]} : vector<8x8xf32> to vector<8x1xf32>
    %126 = vector.extract_strided_slice %120 {offsets = [0, 5], sizes = [8, 1], strides = [1, 1]} : vector<8x8xf32> to vector<8x1xf32>
    %127 = vector.extract_strided_slice %120 {offsets = [0, 6], sizes = [8, 1], strides = [1, 1]} : vector<8x8xf32> to vector<8x1xf32>
    %cst_35 = arith.constant 5.000000e-01 : f32
    %128 = vector.broadcast %cst_35 : f32 to vector<8x1xf32>
    %129 = arith.cmpf ogt, %127, %128 : vector<8x1xf32>
    %130 = vector.broadcast %121 : vector<8x1xf32> to vector<8x128xf32>
    %131 = vector.broadcast %9 : vector<1x128xf32> to vector<8x128xf32>
    %132 = arith.cmpf olt, %130, %131 : vector<8x128xf32>
    %133 = vector.broadcast %9 : vector<1x128xf32> to vector<8x128xf32>
    %134 = vector.broadcast %123 : vector<8x1xf32> to vector<8x128xf32>
    %135 = arith.cmpf olt, %133, %134 : vector<8x128xf32>
    %136 = arith.andi %132, %135 : vector<8x128xi1>
    %137 = vector.broadcast %122 : vector<8x1xf32> to vector<8x128xf32>
    %138 = vector.broadcast %12 : vector<1x128xf32> to vector<8x128xf32>
    %139 = arith.cmpf olt, %137, %138 : vector<8x128xf32>
    %140 = arith.andi %136, %139 : vector<8x128xi1>
    %141 = vector.broadcast %12 : vector<1x128xf32> to vector<8x128xf32>
    %142 = vector.broadcast %124 : vector<8x1xf32> to vector<8x128xf32>
    %143 = arith.cmpf olt, %141, %142 : vector<8x128xf32>
    %144 = arith.andi %140, %143 : vector<8x128xi1>
    %145 = vector.broadcast %6 : vector<1x128xi1> to vector<8x128xi1>
    %146 = arith.andi %144, %145 : vector<8x128xi1>
    %147 = vector.broadcast %129 : vector<8x1xi1> to vector<8x128xi1>
    %148 = arith.andi %146, %147 : vector<8x128xi1>
    %149 = vector.broadcast %0 : vector<1x128xf32> to vector<8x128xf32>
    %150 = vector.broadcast %121 : vector<8x1xf32> to vector<8x128xf32>
    %151 = arith.maximumf %149, %150 : vector<8x128xf32>
    %152 = vector.broadcast %1 : vector<1x128xf32> to vector<8x128xf32>
    %153 = vector.broadcast %122 : vector<8x1xf32> to vector<8x128xf32>
    %154 = arith.maximumf %152, %153 : vector<8x128xf32>
    %155 = vector.broadcast %2 : vector<1x128xf32> to vector<8x128xf32>
    %156 = vector.broadcast %123 : vector<8x1xf32> to vector<8x128xf32>
    %157 = arith.minimumf %155, %156 : vector<8x128xf32>
    %158 = vector.broadcast %3 : vector<1x128xf32> to vector<8x128xf32>
    %159 = vector.broadcast %124 : vector<8x1xf32> to vector<8x128xf32>
    %160 = arith.minimumf %158, %159 : vector<8x128xf32>
    %161 = arith.subf %157, %151 : vector<8x128xf32>
    %cst_36 = arith.constant 0.000000e+00 : f32
    %162 = vector.broadcast %cst_36 : f32 to vector<8x128xf32>
    %163 = arith.maximumf %161, %162 : vector<8x128xf32>
    %164 = arith.subf %160, %154 : vector<8x128xf32>
    %cst_37 = arith.constant 0.000000e+00 : f32
    %165 = vector.broadcast %cst_37 : f32 to vector<8x128xf32>
    %166 = arith.maximumf %164, %165 : vector<8x128xf32>
    %167 = arith.mulf %163, %166 : vector<8x128xf32>
    %168 = arith.subf %123, %121 : vector<8x1xf32>
    %169 = arith.subf %124, %122 : vector<8x1xf32>
    %170 = arith.mulf %168, %169 : vector<8x1xf32>
    %171 = vector.broadcast %15 : vector<1x128xf32> to vector<8x128xf32>
    %172 = vector.broadcast %170 : vector<8x1xf32> to vector<8x128xf32>
    %173 = arith.addf %171, %172 : vector<8x128xf32>
    %174 = arith.subf %173, %167 : vector<8x128xf32>
    %cst_38 = arith.constant 9.99999997E-7 : f32
    %175 = vector.broadcast %cst_38 : f32 to vector<8x128xf32>
    %176 = arith.maximumf %174, %175 : vector<8x128xf32>
    %177 = arith.divf %167, %176 : vector<8x128xf32>
    %cst_39 = arith.constant -1.000000e+00 : f32
    %178 = vector.broadcast %cst_39 : f32 to vector<8x128xf32>
    %179 = arith.select %148, %177, %178 : vector<8x128xi1>, vector<8x128xf32>
    %180 = vector.broadcast %0 : vector<1x128xf32> to vector<8x128xf32>
    %181 = vector.broadcast %121 : vector<8x1xf32> to vector<8x128xf32>
    %182 = arith.subf %180, %181 : vector<8x128xf32>
    %cst_40 = arith.constant 0.000000e+00 : f32
    %183 = vector.broadcast %cst_40 : f32 to vector<8x128xf32>
    %184 = arith.maximumf %183, %182 : vector<8x128xf32>
    %185 = vector.broadcast %125 : vector<8x1xf32> to vector<8x128xf32>
    %186 = arith.minimumf %185, %184 : vector<8x128xf32>
    %187 = vector.broadcast %1 : vector<1x128xf32> to vector<8x128xf32>
    %188 = vector.broadcast %122 : vector<8x1xf32> to vector<8x128xf32>
    %189 = arith.subf %187, %188 : vector<8x128xf32>
    %cst_41 = arith.constant 0.000000e+00 : f32
    %190 = vector.broadcast %cst_41 : f32 to vector<8x128xf32>
    %191 = arith.maximumf %190, %189 : vector<8x128xf32>
    %192 = vector.broadcast %126 : vector<8x1xf32> to vector<8x128xf32>
    %193 = arith.minimumf %192, %191 : vector<8x128xf32>
    %194 = vector.broadcast %2 : vector<1x128xf32> to vector<8x128xf32>
    %195 = vector.broadcast %121 : vector<8x1xf32> to vector<8x128xf32>
    %196 = arith.subf %194, %195 : vector<8x128xf32>
    %cst_42 = arith.constant 0.000000e+00 : f32
    %197 = vector.broadcast %cst_42 : f32 to vector<8x128xf32>
    %198 = arith.maximumf %197, %196 : vector<8x128xf32>
    %199 = vector.broadcast %125 : vector<8x1xf32> to vector<8x128xf32>
    %200 = arith.minimumf %199, %198 : vector<8x128xf32>
    %201 = vector.broadcast %3 : vector<1x128xf32> to vector<8x128xf32>
    %202 = vector.broadcast %122 : vector<8x1xf32> to vector<8x128xf32>
    %203 = arith.subf %201, %202 : vector<8x128xf32>
    %cst_43 = arith.constant 0.000000e+00 : f32
    %204 = vector.broadcast %cst_43 : f32 to vector<8x128xf32>
    %205 = arith.maximumf %204, %203 : vector<8x128xf32>
    %206 = vector.broadcast %126 : vector<8x1xf32> to vector<8x128xf32>
    %207 = arith.minimumf %206, %205 : vector<8x128xf32>
    %c0_44 = arith.constant 0 : index
    %c8_45 = arith.constant 8 : index
    %c0_46 = arith.constant 0 : index
    %208 = vector.load %arg3[%c0_44, %c8_45, %c0_46] : memref<4x40x128xf32, #tpu.memory_space<vmem>>, vector<1x8x128xf32>
    %209 = vector.shape_cast %208 : vector<1x8x128xf32> to vector<8x128xf32>
    %210 = vector.shape_cast %186 : vector<8x128xf32> to vector<1x8x128xf32>
    tpu.vector_store %arg3[%c0_44, %c8_45, %c0_46], %210 {strides = array<i32>} : memref<4x40x128xf32, #tpu.memory_space<vmem>>, vector<1x8x128xf32>,
    %c1_47 = arith.constant 1 : index
    %c8_48 = arith.constant 8 : index
    %c0_49 = arith.constant 0 : index
    %211 = vector.load %arg3[%c1_47, %c8_48, %c0_49] : memref<4x40x128xf32, #tpu.memory_space<vmem>>, vector<1x8x128xf32>
    %212 = vector.shape_cast %211 : vector<1x8x128xf32> to vector<8x128xf32>
    %213 = vector.shape_cast %193 : vector<8x128xf32> to vector<1x8x128xf32>
    tpu.vector_store %arg3[%c1_47, %c8_48, %c0_49], %213 {strides = array<i32>} : memref<4x40x128xf32, #tpu.memory_space<vmem>>, vector<1x8x128xf32>,
    %c2_50 = arith.constant 2 : index
    %c8_51 = arith.constant 8 : index
    %c0_52 = arith.constant 0 : index
    %214 = vector.load %arg3[%c2_50, %c8_51, %c0_52] : memref<4x40x128xf32, #tpu.memory_space<vmem>>, vector<1x8x128xf32>
    %215 = vector.shape_cast %214 : vector<1x8x128xf32> to vector<8x128xf32>
    %216 = vector.shape_cast %200 : vector<8x128xf32> to vector<1x8x128xf32>
    tpu.vector_store %arg3[%c2_50, %c8_51, %c0_52], %216 {strides = array<i32>} : memref<4x40x128xf32, #tpu.memory_space<vmem>>, vector<1x8x128xf32>,
    %c3_53 = arith.constant 3 : index
    %c8_54 = arith.constant 8 : index
    %c0_55 = arith.constant 0 : index
    %217 = vector.load %arg3[%c3_53, %c8_54, %c0_55] : memref<4x40x128xf32, #tpu.memory_space<vmem>>, vector<1x8x128xf32>
    %218 = vector.shape_cast %217 : vector<1x8x128xf32> to vector<8x128xf32>
    %219 = vector.shape_cast %207 : vector<8x128xf32> to vector<1x8x128xf32>
    tpu.vector_store %arg3[%c3_53, %c8_54, %c0_55], %219 {strides = array<i32>} : memref<4x40x128xf32, #tpu.memory_space<vmem>>, vector<1x8x128xf32>,
    %220 = arith.extui %148 : vector<8x128xi1> to vector<8x128xi32>
    %221 = arith.sitofp %220 : vector<8x128xi32> to vector<8x128xf32>
    %c8_56 = arith.constant 8 : index
    %c0_57 = arith.constant 0 : index
    %222 = vector.load %arg4[%c8_56, %c0_57] : memref<40x128xf32, #tpu.memory_space<vmem>>, vector<8x128xf32>
    tpu.vector_store %arg4[%c8_56, %c0_57], %221 {strides = array<i32>} : memref<40x128xf32, #tpu.memory_space<vmem>>, vector<8x128xf32>,
    %c8_58 = arith.constant 8 : index
    %c0_59 = arith.constant 0 : index
    %223 = vector.load %arg5[%c8_58, %c0_59] : memref<40x128xf32, #tpu.memory_space<vmem>>, vector<8x128xf32>
    tpu.vector_store %arg5[%c8_58, %c0_59], %179 {strides = array<i32>} : memref<40x128xf32, #tpu.memory_space<vmem>>, vector<8x128xf32>,
    %c16 = arith.constant 16 : index
    %c0_60 = arith.constant 0 : index
    %224 = vector.load %arg1[%c16, %c0_60] : memref<40x8xf32, #tpu.memory_space<vmem>>, vector<8x8xf32>
    %225 = vector.extract_strided_slice %224 {offsets = [0, 0], sizes = [8, 1], strides = [1, 1]} : vector<8x8xf32> to vector<8x1xf32>
    %226 = vector.extract_strided_slice %224 {offsets = [0, 1], sizes = [8, 1], strides = [1, 1]} : vector<8x8xf32> to vector<8x1xf32>
    %227 = vector.extract_strided_slice %224 {offsets = [0, 2], sizes = [8, 1], strides = [1, 1]} : vector<8x8xf32> to vector<8x1xf32>
    %228 = vector.extract_strided_slice %224 {offsets = [0, 3], sizes = [8, 1], strides = [1, 1]} : vector<8x8xf32> to vector<8x1xf32>
    %229 = vector.extract_strided_slice %224 {offsets = [0, 4], sizes = [8, 1], strides = [1, 1]} : vector<8x8xf32> to vector<8x1xf32>
    %230 = vector.extract_strided_slice %224 {offsets = [0, 5], sizes = [8, 1], strides = [1, 1]} : vector<8x8xf32> to vector<8x1xf32>
    %231 = vector.extract_strided_slice %224 {offsets = [0, 6], sizes = [8, 1], strides = [1, 1]} : vector<8x8xf32> to vector<8x1xf32>
    %cst_61 = arith.constant 5.000000e-01 : f32
    %232 = vector.broadcast %cst_61 : f32 to vector<8x1xf32>
    %233 = arith.cmpf ogt, %231, %232 : vector<8x1xf32>
    %234 = vector.broadcast %225 : vector<8x1xf32> to vector<8x128xf32>
    %235 = vector.broadcast %9 : vector<1x128xf32> to vector<8x128xf32>
    %236 = arith.cmpf olt, %234, %235 : vector<8x128xf32>
    %237 = vector.broadcast %9 : vector<1x128xf32> to vector<8x128xf32>
    %238 = vector.broadcast %227 : vector<8x1xf32> to vector<8x128xf32>
    %239 = arith.cmpf olt, %237, %238 : vector<8x128xf32>
    %240 = arith.andi %236, %239 : vector<8x128xi1>
    %241 = vector.broadcast %226 : vector<8x1xf32> to vector<8x128xf32>
    %242 = vector.broadcast %12 : vector<1x128xf32> to vector<8x128xf32>
    %243 = arith.cmpf olt, %241, %242 : vector<8x128xf32>
    %244 = arith.andi %240, %243 : vector<8x128xi1>
    %245 = vector.broadcast %12 : vector<1x128xf32> to vector<8x128xf32>
    %246 = vector.broadcast %228 : vector<8x1xf32> to vector<8x128xf32>
    %247 = arith.cmpf olt, %245, %246 : vector<8x128xf32>
    %248 = arith.andi %244, %247 : vector<8x128xi1>
    %249 = vector.broadcast %6 : vector<1x128xi1> to vector<8x128xi1>
    %250 = arith.andi %248, %249 : vector<8x128xi1>
    %251 = vector.broadcast %233 : vector<8x1xi1> to vector<8x128xi1>
    %252 = arith.andi %250, %251 : vector<8x128xi1>
    %253 = vector.broadcast %0 : vector<1x128xf32> to vector<8x128xf32>
    %254 = vector.broadcast %225 : vector<8x1xf32> to vector<8x128xf32>
    %255 = arith.maximumf %253, %254 : vector<8x128xf32>
    %256 = vector.broadcast %1 : vector<1x128xf32> to vector<8x128xf32>
    %257 = vector.broadcast %226 : vector<8x1xf32> to vector<8x128xf32>
    %258 = arith.maximumf %256, %257 : vector<8x128xf32>
    %259 = vector.broadcast %2 : vector<1x128xf32> to vector<8x128xf32>
    %260 = vector.broadcast %227 : vector<8x1xf32> to vector<8x128xf32>
    %261 = arith.minimumf %259, %260 : vector<8x128xf32>
    %262 = vector.broadcast %3 : vector<1x128xf32> to vector<8x128xf32>
    %263 = vector.broadcast %228 : vector<8x1xf32> to vector<8x128xf32>
    %264 = arith.minimumf %262, %263 : vector<8x128xf32>
    %265 = arith.subf %261, %255 : vector<8x128xf32>
    %cst_62 = arith.constant 0.000000e+00 : f32
    %266 = vector.broadcast %cst_62 : f32 to vector<8x128xf32>
    %267 = arith.maximumf %265, %266 : vector<8x128xf32>
    %268 = arith.subf %264, %258 : vector<8x128xf32>
    %cst_63 = arith.constant 0.000000e+00 : f32
    %269 = vector.broadcast %cst_63 : f32 to vector<8x128xf32>
    %270 = arith.maximumf %268, %269 : vector<8x128xf32>
    %271 = arith.mulf %267, %270 : vector<8x128xf32>
    %272 = arith.subf %227, %225 : vector<8x1xf32>
    %273 = arith.subf %228, %226 : vector<8x1xf32>
    %274 = arith.mulf %272, %273 : vector<8x1xf32>
    %275 = vector.broadcast %15 : vector<1x128xf32> to vector<8x128xf32>
    %276 = vector.broadcast %274 : vector<8x1xf32> to vector<8x128xf32>
    %277 = arith.addf %275, %276 : vector<8x128xf32>
    %278 = arith.subf %277, %271 : vector<8x128xf32>
    %cst_64 = arith.constant 9.99999997E-7 : f32
    %279 = vector.broadcast %cst_64 : f32 to vector<8x128xf32>
    %280 = arith.maximumf %278, %279 : vector<8x128xf32>
    %281 = arith.divf %271, %280 : vector<8x128xf32>
    %cst_65 = arith.constant -1.000000e+00 : f32
    %282 = vector.broadcast %cst_65 : f32 to vector<8x128xf32>
    %283 = arith.select %252, %281, %282 : vector<8x128xi1>, vector<8x128xf32>
    %284 = vector.broadcast %0 : vector<1x128xf32> to vector<8x128xf32>
    %285 = vector.broadcast %225 : vector<8x1xf32> to vector<8x128xf32>
    %286 = arith.subf %284, %285 : vector<8x128xf32>
    %cst_66 = arith.constant 0.000000e+00 : f32
    %287 = vector.broadcast %cst_66 : f32 to vector<8x128xf32>
    %288 = arith.maximumf %287, %286 : vector<8x128xf32>
    %289 = vector.broadcast %229 : vector<8x1xf32> to vector<8x128xf32>
    %290 = arith.minimumf %289, %288 : vector<8x128xf32>
    %291 = vector.broadcast %1 : vector<1x128xf32> to vector<8x128xf32>
    %292 = vector.broadcast %226 : vector<8x1xf32> to vector<8x128xf32>
    %293 = arith.subf %291, %292 : vector<8x128xf32>
    %cst_67 = arith.constant 0.000000e+00 : f32
    %294 = vector.broadcast %cst_67 : f32 to vector<8x128xf32>
    %295 = arith.maximumf %294, %293 : vector<8x128xf32>
    %296 = vector.broadcast %230 : vector<8x1xf32> to vector<8x128xf32>
    %297 = arith.minimumf %296, %295 : vector<8x128xf32>
    %298 = vector.broadcast %2 : vector<1x128xf32> to vector<8x128xf32>
    %299 = vector.broadcast %225 : vector<8x1xf32> to vector<8x128xf32>
    %300 = arith.subf %298, %299 : vector<8x128xf32>
    %cst_68 = arith.constant 0.000000e+00 : f32
    %301 = vector.broadcast %cst_68 : f32 to vector<8x128xf32>
    %302 = arith.maximumf %301, %300 : vector<8x128xf32>
    %303 = vector.broadcast %229 : vector<8x1xf32> to vector<8x128xf32>
    %304 = arith.minimumf %303, %302 : vector<8x128xf32>
    %305 = vector.broadcast %3 : vector<1x128xf32> to vector<8x128xf32>
    %306 = vector.broadcast %226 : vector<8x1xf32> to vector<8x128xf32>
    %307 = arith.subf %305, %306 : vector<8x128xf32>
    %cst_69 = arith.constant 0.000000e+00 : f32
    %308 = vector.broadcast %cst_69 : f32 to vector<8x128xf32>
    %309 = arith.maximumf %308, %307 : vector<8x128xf32>
    %310 = vector.broadcast %230 : vector<8x1xf32> to vector<8x128xf32>
    %311 = arith.minimumf %310, %309 : vector<8x128xf32>
    %c0_70 = arith.constant 0 : index
    %c16_71 = arith.constant 16 : index
    %c0_72 = arith.constant 0 : index
    %312 = vector.load %arg3[%c0_70, %c16_71, %c0_72] : memref<4x40x128xf32, #tpu.memory_space<vmem>>, vector<1x8x128xf32>
    %313 = vector.shape_cast %312 : vector<1x8x128xf32> to vector<8x128xf32>
    %314 = vector.shape_cast %290 : vector<8x128xf32> to vector<1x8x128xf32>
    tpu.vector_store %arg3[%c0_70, %c16_71, %c0_72], %314 {strides = array<i32>} : memref<4x40x128xf32, #tpu.memory_space<vmem>>, vector<1x8x128xf32>,
    %c1_73 = arith.constant 1 : index
    %c16_74 = arith.constant 16 : index
    %c0_75 = arith.constant 0 : index
    %315 = vector.load %arg3[%c1_73, %c16_74, %c0_75] : memref<4x40x128xf32, #tpu.memory_space<vmem>>, vector<1x8x128xf32>
    %316 = vector.shape_cast %315 : vector<1x8x128xf32> to vector<8x128xf32>
    %317 = vector.shape_cast %297 : vector<8x128xf32> to vector<1x8x128xf32>
    tpu.vector_store %arg3[%c1_73, %c16_74, %c0_75], %317 {strides = array<i32>} : memref<4x40x128xf32, #tpu.memory_space<vmem>>, vector<1x8x128xf32>,
    %c2_76 = arith.constant 2 : index
    %c16_77 = arith.constant 16 : index
    %c0_78 = arith.constant 0 : index
    %318 = vector.load %arg3[%c2_76, %c16_77, %c0_78] : memref<4x40x128xf32, #tpu.memory_space<vmem>>, vector<1x8x128xf32>
    %319 = vector.shape_cast %318 : vector<1x8x128xf32> to vector<8x128xf32>
    %320 = vector.shape_cast %304 : vector<8x128xf32> to vector<1x8x128xf32>
    tpu.vector_store %arg3[%c2_76, %c16_77, %c0_78], %320 {strides = array<i32>} : memref<4x40x128xf32, #tpu.memory_space<vmem>>, vector<1x8x128xf32>,
    %c3_79 = arith.constant 3 : index
    %c16_80 = arith.constant 16 : index
    %c0_81 = arith.constant 0 : index
    %321 = vector.load %arg3[%c3_79, %c16_80, %c0_81] : memref<4x40x128xf32, #tpu.memory_space<vmem>>, vector<1x8x128xf32>
    %322 = vector.shape_cast %321 : vector<1x8x128xf32> to vector<8x128xf32>
    %323 = vector.shape_cast %311 : vector<8x128xf32> to vector<1x8x128xf32>
    tpu.vector_store %arg3[%c3_79, %c16_80, %c0_81], %323 {strides = array<i32>} : memref<4x40x128xf32, #tpu.memory_space<vmem>>, vector<1x8x128xf32>,
    %324 = arith.extui %252 : vector<8x128xi1> to vector<8x128xi32>
    %325 = arith.sitofp %324 : vector<8x128xi32> to vector<8x128xf32>
    %c16_82 = arith.constant 16 : index
    %c0_83 = arith.constant 0 : index
    %326 = vector.load %arg4[%c16_82, %c0_83] : memref<40x128xf32, #tpu.memory_space<vmem>>, vector<8x128xf32>
    tpu.vector_store %arg4[%c16_82, %c0_83], %325 {strides = array<i32>} : memref<40x128xf32, #tpu.memory_space<vmem>>, vector<8x128xf32>,
    %c16_84 = arith.constant 16 : index
    %c0_85 = arith.constant 0 : index
    %327 = vector.load %arg5[%c16_84, %c0_85] : memref<40x128xf32, #tpu.memory_space<vmem>>, vector<8x128xf32>
    tpu.vector_store %arg5[%c16_84, %c0_85], %283 {strides = array<i32>} : memref<40x128xf32, #tpu.memory_space<vmem>>, vector<8x128xf32>,
    %c24 = arith.constant 24 : index
    %c0_86 = arith.constant 0 : index
    %328 = vector.load %arg1[%c24, %c0_86] : memref<40x8xf32, #tpu.memory_space<vmem>>, vector<8x8xf32>
    %329 = vector.extract_strided_slice %328 {offsets = [0, 0], sizes = [8, 1], strides = [1, 1]} : vector<8x8xf32> to vector<8x1xf32>
    %330 = vector.extract_strided_slice %328 {offsets = [0, 1], sizes = [8, 1], strides = [1, 1]} : vector<8x8xf32> to vector<8x1xf32>
    %331 = vector.extract_strided_slice %328 {offsets = [0, 2], sizes = [8, 1], strides = [1, 1]} : vector<8x8xf32> to vector<8x1xf32>
    %332 = vector.extract_strided_slice %328 {offsets = [0, 3], sizes = [8, 1], strides = [1, 1]} : vector<8x8xf32> to vector<8x1xf32>
    %333 = vector.extract_strided_slice %328 {offsets = [0, 4], sizes = [8, 1], strides = [1, 1]} : vector<8x8xf32> to vector<8x1xf32>
    %334 = vector.extract_strided_slice %328 {offsets = [0, 5], sizes = [8, 1], strides = [1, 1]} : vector<8x8xf32> to vector<8x1xf32>
    %335 = vector.extract_strided_slice %328 {offsets = [0, 6], sizes = [8, 1], strides = [1, 1]} : vector<8x8xf32> to vector<8x1xf32>
    %cst_87 = arith.constant 5.000000e-01 : f32
    %336 = vector.broadcast %cst_87 : f32 to vector<8x1xf32>
    %337 = arith.cmpf ogt, %335, %336 : vector<8x1xf32>
    %338 = vector.broadcast %329 : vector<8x1xf32> to vector<8x128xf32>
    %339 = vector.broadcast %9 : vector<1x128xf32> to vector<8x128xf32>
    %340 = arith.cmpf olt, %338, %339 : vector<8x128xf32>
    %341 = vector.broadcast %9 : vector<1x128xf32> to vector<8x128xf32>
    %342 = vector.broadcast %331 : vector<8x1xf32> to vector<8x128xf32>
    %343 = arith.cmpf olt, %341, %342 : vector<8x128xf32>
    %344 = arith.andi %340, %343 : vector<8x128xi1>
    %345 = vector.broadcast %330 : vector<8x1xf32> to vector<8x128xf32>
    %346 = vector.broadcast %12 : vector<1x128xf32> to vector<8x128xf32>
    %347 = arith.cmpf olt, %345, %346 : vector<8x128xf32>
    %348 = arith.andi %344, %347 : vector<8x128xi1>
    %349 = vector.broadcast %12 : vector<1x128xf32> to vector<8x128xf32>
    %350 = vector.broadcast %332 : vector<8x1xf32> to vector<8x128xf32>
    %351 = arith.cmpf olt, %349, %350 : vector<8x128xf32>
    %352 = arith.andi %348, %351 : vector<8x128xi1>
    %353 = vector.broadcast %6 : vector<1x128xi1> to vector<8x128xi1>
    %354 = arith.andi %352, %353 : vector<8x128xi1>
    %355 = vector.broadcast %337 : vector<8x1xi1> to vector<8x128xi1>
    %356 = arith.andi %354, %355 : vector<8x128xi1>
    %357 = vector.broadcast %0 : vector<1x128xf32> to vector<8x128xf32>
    %358 = vector.broadcast %329 : vector<8x1xf32> to vector<8x128xf32>
    %359 = arith.maximumf %357, %358 : vector<8x128xf32>
    %360 = vector.broadcast %1 : vector<1x128xf32> to vector<8x128xf32>
    %361 = vector.broadcast %330 : vector<8x1xf32> to vector<8x128xf32>
    %362 = arith.maximumf %360, %361 : vector<8x128xf32>
    %363 = vector.broadcast %2 : vector<1x128xf32> to vector<8x128xf32>
    %364 = vector.broadcast %331 : vector<8x1xf32> to vector<8x128xf32>
    %365 = arith.minimumf %363, %364 : vector<8x128xf32>
    %366 = vector.broadcast %3 : vector<1x128xf32> to vector<8x128xf32>
    %367 = vector.broadcast %332 : vector<8x1xf32> to vector<8x128xf32>
    %368 = arith.minimumf %366, %367 : vector<8x128xf32>
    %369 = arith.subf %365, %359 : vector<8x128xf32>
    %cst_88 = arith.constant 0.000000e+00 : f32
    %370 = vector.broadcast %cst_88 : f32 to vector<8x128xf32>
    %371 = arith.maximumf %369, %370 : vector<8x128xf32>
    %372 = arith.subf %368, %362 : vector<8x128xf32>
    %cst_89 = arith.constant 0.000000e+00 : f32
    %373 = vector.broadcast %cst_89 : f32 to vector<8x128xf32>
    %374 = arith.maximumf %372, %373 : vector<8x128xf32>
    %375 = arith.mulf %371, %374 : vector<8x128xf32>
    %376 = arith.subf %331, %329 : vector<8x1xf32>
    %377 = arith.subf %332, %330 : vector<8x1xf32>
    %378 = arith.mulf %376, %377 : vector<8x1xf32>
    %379 = vector.broadcast %15 : vector<1x128xf32> to vector<8x128xf32>
    %380 = vector.broadcast %378 : vector<8x1xf32> to vector<8x128xf32>
    %381 = arith.addf %379, %380 : vector<8x128xf32>
    %382 = arith.subf %381, %375 : vector<8x128xf32>
    %cst_90 = arith.constant 9.99999997E-7 : f32
    %383 = vector.broadcast %cst_90 : f32 to vector<8x128xf32>
    %384 = arith.maximumf %382, %383 : vector<8x128xf32>
    %385 = arith.divf %375, %384 : vector<8x128xf32>
    %cst_91 = arith.constant -1.000000e+00 : f32
    %386 = vector.broadcast %cst_91 : f32 to vector<8x128xf32>
    %387 = arith.select %356, %385, %386 : vector<8x128xi1>, vector<8x128xf32>
    %388 = vector.broadcast %0 : vector<1x128xf32> to vector<8x128xf32>
    %389 = vector.broadcast %329 : vector<8x1xf32> to vector<8x128xf32>
    %390 = arith.subf %388, %389 : vector<8x128xf32>
    %cst_92 = arith.constant 0.000000e+00 : f32
    %391 = vector.broadcast %cst_92 : f32 to vector<8x128xf32>
    %392 = arith.maximumf %391, %390 : vector<8x128xf32>
    %393 = vector.broadcast %333 : vector<8x1xf32> to vector<8x128xf32>
    %394 = arith.minimumf %393, %392 : vector<8x128xf32>
    %395 = vector.broadcast %1 : vector<1x128xf32> to vector<8x128xf32>
    %396 = vector.broadcast %330 : vector<8x1xf32> to vector<8x128xf32>
    %397 = arith.subf %395, %396 : vector<8x128xf32>
    %cst_93 = arith.constant 0.000000e+00 : f32
    %398 = vector.broadcast %cst_93 : f32 to vector<8x128xf32>
    %399 = arith.maximumf %398, %397 : vector<8x128xf32>
    %400 = vector.broadcast %334 : vector<8x1xf32> to vector<8x128xf32>
    %401 = arith.minimumf %400, %399 : vector<8x128xf32>
    %402 = vector.broadcast %2 : vector<1x128xf32> to vector<8x128xf32>
    %403 = vector.broadcast %329 : vector<8x1xf32> to vector<8x128xf32>
    %404 = arith.subf %402, %403 : vector<8x128xf32>
    %cst_94 = arith.constant 0.000000e+00 : f32
    %405 = vector.broadcast %cst_94 : f32 to vector<8x128xf32>
    %406 = arith.maximumf %405, %404 : vector<8x128xf32>
    %407 = vector.broadcast %333 : vector<8x1xf32> to vector<8x128xf32>
    %408 = arith.minimumf %407, %406 : vector<8x128xf32>
    %409 = vector.broadcast %3 : vector<1x128xf32> to vector<8x128xf32>
    %410 = vector.broadcast %330 : vector<8x1xf32> to vector<8x128xf32>
    %411 = arith.subf %409, %410 : vector<8x128xf32>
    %cst_95 = arith.constant 0.000000e+00 : f32
    %412 = vector.broadcast %cst_95 : f32 to vector<8x128xf32>
    %413 = arith.maximumf %412, %411 : vector<8x128xf32>
    %414 = vector.broadcast %334 : vector<8x1xf32> to vector<8x128xf32>
    %415 = arith.minimumf %414, %413 : vector<8x128xf32>
    %c0_96 = arith.constant 0 : index
    %c24_97 = arith.constant 24 : index
    %c0_98 = arith.constant 0 : index
    %416 = vector.load %arg3[%c0_96, %c24_97, %c0_98] : memref<4x40x128xf32, #tpu.memory_space<vmem>>, vector<1x8x128xf32>
    %417 = vector.shape_cast %416 : vector<1x8x128xf32> to vector<8x128xf32>
    %418 = vector.shape_cast %394 : vector<8x128xf32> to vector<1x8x128xf32>
    tpu.vector_store %arg3[%c0_96, %c24_97, %c0_98], %418 {strides = array<i32>} : memref<4x40x128xf32, #tpu.memory_space<vmem>>, vector<1x8x128xf32>,
    %c1_99 = arith.constant 1 : index
    %c24_100 = arith.constant 24 : index
    %c0_101 = arith.constant 0 : index
    %419 = vector.load %arg3[%c1_99, %c24_100, %c0_101] : memref<4x40x128xf32, #tpu.memory_space<vmem>>, vector<1x8x128xf32>
    %420 = vector.shape_cast %419 : vector<1x8x128xf32> to vector<8x128xf32>
    %421 = vector.shape_cast %401 : vector<8x128xf32> to vector<1x8x128xf32>
    tpu.vector_store %arg3[%c1_99, %c24_100, %c0_101], %421 {strides = array<i32>} : memref<4x40x128xf32, #tpu.memory_space<vmem>>, vector<1x8x128xf32>,
    %c2_102 = arith.constant 2 : index
    %c24_103 = arith.constant 24 : index
    %c0_104 = arith.constant 0 : index
    %422 = vector.load %arg3[%c2_102, %c24_103, %c0_104] : memref<4x40x128xf32, #tpu.memory_space<vmem>>, vector<1x8x128xf32>
    %423 = vector.shape_cast %422 : vector<1x8x128xf32> to vector<8x128xf32>
    %424 = vector.shape_cast %408 : vector<8x128xf32> to vector<1x8x128xf32>
    tpu.vector_store %arg3[%c2_102, %c24_103, %c0_104], %424 {strides = array<i32>} : memref<4x40x128xf32, #tpu.memory_space<vmem>>, vector<1x8x128xf32>,
    %c3_105 = arith.constant 3 : index
    %c24_106 = arith.constant 24 : index
    %c0_107 = arith.constant 0 : index
    %425 = vector.load %arg3[%c3_105, %c24_106, %c0_107] : memref<4x40x128xf32, #tpu.memory_space<vmem>>, vector<1x8x128xf32>
    %426 = vector.shape_cast %425 : vector<1x8x128xf32> to vector<8x128xf32>
    %427 = vector.shape_cast %415 : vector<8x128xf32> to vector<1x8x128xf32>
    tpu.vector_store %arg3[%c3_105, %c24_106, %c0_107], %427 {strides = array<i32>} : memref<4x40x128xf32, #tpu.memory_space<vmem>>, vector<1x8x128xf32>,
    %428 = arith.extui %356 : vector<8x128xi1> to vector<8x128xi32>
    %429 = arith.sitofp %428 : vector<8x128xi32> to vector<8x128xf32>
    %c24_108 = arith.constant 24 : index
    %c0_109 = arith.constant 0 : index
    %430 = vector.load %arg4[%c24_108, %c0_109] : memref<40x128xf32, #tpu.memory_space<vmem>>, vector<8x128xf32>
    tpu.vector_store %arg4[%c24_108, %c0_109], %429 {strides = array<i32>} : memref<40x128xf32, #tpu.memory_space<vmem>>, vector<8x128xf32>,
    %c24_110 = arith.constant 24 : index
    %c0_111 = arith.constant 0 : index
    %431 = vector.load %arg5[%c24_110, %c0_111] : memref<40x128xf32, #tpu.memory_space<vmem>>, vector<8x128xf32>
    tpu.vector_store %arg5[%c24_110, %c0_111], %387 {strides = array<i32>} : memref<40x128xf32, #tpu.memory_space<vmem>>, vector<8x128xf32>,
    %c32 = arith.constant 32 : index
    %c0_112 = arith.constant 0 : index
    %432 = vector.load %arg1[%c32, %c0_112] : memref<40x8xf32, #tpu.memory_space<vmem>>, vector<8x8xf32>
    %433 = vector.extract_strided_slice %432 {offsets = [0, 0], sizes = [8, 1], strides = [1, 1]} : vector<8x8xf32> to vector<8x1xf32>
    %434 = vector.extract_strided_slice %432 {offsets = [0, 1], sizes = [8, 1], strides = [1, 1]} : vector<8x8xf32> to vector<8x1xf32>
    %435 = vector.extract_strided_slice %432 {offsets = [0, 2], sizes = [8, 1], strides = [1, 1]} : vector<8x8xf32> to vector<8x1xf32>
    %436 = vector.extract_strided_slice %432 {offsets = [0, 3], sizes = [8, 1], strides = [1, 1]} : vector<8x8xf32> to vector<8x1xf32>
    %437 = vector.extract_strided_slice %432 {offsets = [0, 4], sizes = [8, 1], strides = [1, 1]} : vector<8x8xf32> to vector<8x1xf32>
    %438 = vector.extract_strided_slice %432 {offsets = [0, 5], sizes = [8, 1], strides = [1, 1]} : vector<8x8xf32> to vector<8x1xf32>
    %439 = vector.extract_strided_slice %432 {offsets = [0, 6], sizes = [8, 1], strides = [1, 1]} : vector<8x8xf32> to vector<8x1xf32>
    %cst_113 = arith.constant 5.000000e-01 : f32
    %440 = vector.broadcast %cst_113 : f32 to vector<8x1xf32>
    %441 = arith.cmpf ogt, %439, %440 : vector<8x1xf32>
    %442 = vector.broadcast %433 : vector<8x1xf32> to vector<8x128xf32>
    %443 = vector.broadcast %9 : vector<1x128xf32> to vector<8x128xf32>
    %444 = arith.cmpf olt, %442, %443 : vector<8x128xf32>
    %445 = vector.broadcast %9 : vector<1x128xf32> to vector<8x128xf32>
    %446 = vector.broadcast %435 : vector<8x1xf32> to vector<8x128xf32>
    %447 = arith.cmpf olt, %445, %446 : vector<8x128xf32>
    %448 = arith.andi %444, %447 : vector<8x128xi1>
    %449 = vector.broadcast %434 : vector<8x1xf32> to vector<8x128xf32>
    %450 = vector.broadcast %12 : vector<1x128xf32> to vector<8x128xf32>
    %451 = arith.cmpf olt, %449, %450 : vector<8x128xf32>
    %452 = arith.andi %448, %451 : vector<8x128xi1>
    %453 = vector.broadcast %12 : vector<1x128xf32> to vector<8x128xf32>
    %454 = vector.broadcast %436 : vector<8x1xf32> to vector<8x128xf32>
    %455 = arith.cmpf olt, %453, %454 : vector<8x128xf32>
    %456 = arith.andi %452, %455 : vector<8x128xi1>
    %457 = vector.broadcast %6 : vector<1x128xi1> to vector<8x128xi1>
    %458 = arith.andi %456, %457 : vector<8x128xi1>
    %459 = vector.broadcast %441 : vector<8x1xi1> to vector<8x128xi1>
    %460 = arith.andi %458, %459 : vector<8x128xi1>
    %461 = vector.broadcast %0 : vector<1x128xf32> to vector<8x128xf32>
    %462 = vector.broadcast %433 : vector<8x1xf32> to vector<8x128xf32>
    %463 = arith.maximumf %461, %462 : vector<8x128xf32>
    %464 = vector.broadcast %1 : vector<1x128xf32> to vector<8x128xf32>
    %465 = vector.broadcast %434 : vector<8x1xf32> to vector<8x128xf32>
    %466 = arith.maximumf %464, %465 : vector<8x128xf32>
    %467 = vector.broadcast %2 : vector<1x128xf32> to vector<8x128xf32>
    %468 = vector.broadcast %435 : vector<8x1xf32> to vector<8x128xf32>
    %469 = arith.minimumf %467, %468 : vector<8x128xf32>
    %470 = vector.broadcast %3 : vector<1x128xf32> to vector<8x128xf32>
    %471 = vector.broadcast %436 : vector<8x1xf32> to vector<8x128xf32>
    %472 = arith.minimumf %470, %471 : vector<8x128xf32>
    %473 = arith.subf %469, %463 : vector<8x128xf32>
    %cst_114 = arith.constant 0.000000e+00 : f32
    %474 = vector.broadcast %cst_114 : f32 to vector<8x128xf32>
    %475 = arith.maximumf %473, %474 : vector<8x128xf32>
    %476 = arith.subf %472, %466 : vector<8x128xf32>
    %cst_115 = arith.constant 0.000000e+00 : f32
    %477 = vector.broadcast %cst_115 : f32 to vector<8x128xf32>
    %478 = arith.maximumf %476, %477 : vector<8x128xf32>
    %479 = arith.mulf %475, %478 : vector<8x128xf32>
    %480 = arith.subf %435, %433 : vector<8x1xf32>
    %481 = arith.subf %436, %434 : vector<8x1xf32>
    %482 = arith.mulf %480, %481 : vector<8x1xf32>
    %483 = vector.broadcast %15 : vector<1x128xf32> to vector<8x128xf32>
    %484 = vector.broadcast %482 : vector<8x1xf32> to vector<8x128xf32>
    %485 = arith.addf %483, %484 : vector<8x128xf32>
    %486 = arith.subf %485, %479 : vector<8x128xf32>
    %cst_116 = arith.constant 9.99999997E-7 : f32
    %487 = vector.broadcast %cst_116 : f32 to vector<8x128xf32>
    %488 = arith.maximumf %486, %487 : vector<8x128xf32>
    %489 = arith.divf %479, %488 : vector<8x128xf32>
    %cst_117 = arith.constant -1.000000e+00 : f32
    %490 = vector.broadcast %cst_117 : f32 to vector<8x128xf32>
    %491 = arith.select %460, %489, %490 : vector<8x128xi1>, vector<8x128xf32>
    %492 = vector.broadcast %0 : vector<1x128xf32> to vector<8x128xf32>
    %493 = vector.broadcast %433 : vector<8x1xf32> to vector<8x128xf32>
    %494 = arith.subf %492, %493 : vector<8x128xf32>
    %cst_118 = arith.constant 0.000000e+00 : f32
    %495 = vector.broadcast %cst_118 : f32 to vector<8x128xf32>
    %496 = arith.maximumf %495, %494 : vector<8x128xf32>
    %497 = vector.broadcast %437 : vector<8x1xf32> to vector<8x128xf32>
    %498 = arith.minimumf %497, %496 : vector<8x128xf32>
    %499 = vector.broadcast %1 : vector<1x128xf32> to vector<8x128xf32>
    %500 = vector.broadcast %434 : vector<8x1xf32> to vector<8x128xf32>
    %501 = arith.subf %499, %500 : vector<8x128xf32>
    %cst_119 = arith.constant 0.000000e+00 : f32
    %502 = vector.broadcast %cst_119 : f32 to vector<8x128xf32>
    %503 = arith.maximumf %502, %501 : vector<8x128xf32>
    %504 = vector.broadcast %438 : vector<8x1xf32> to vector<8x128xf32>
    %505 = arith.minimumf %504, %503 : vector<8x128xf32>
    %506 = vector.broadcast %2 : vector<1x128xf32> to vector<8x128xf32>
    %507 = vector.broadcast %433 : vector<8x1xf32> to vector<8x128xf32>
    %508 = arith.subf %506, %507 : vector<8x128xf32>
    %cst_120 = arith.constant 0.000000e+00 : f32
    %509 = vector.broadcast %cst_120 : f32 to vector<8x128xf32>
    %510 = arith.maximumf %509, %508 : vector<8x128xf32>
    %511 = vector.broadcast %437 : vector<8x1xf32> to vector<8x128xf32>
    %512 = arith.minimumf %511, %510 : vector<8x128xf32>
    %513 = vector.broadcast %3 : vector<1x128xf32> to vector<8x128xf32>
    %514 = vector.broadcast %434 : vector<8x1xf32> to vector<8x128xf32>
    %515 = arith.subf %513, %514 : vector<8x128xf32>
    %cst_121 = arith.constant 0.000000e+00 : f32
    %516 = vector.broadcast %cst_121 : f32 to vector<8x128xf32>
    %517 = arith.maximumf %516, %515 : vector<8x128xf32>
    %518 = vector.broadcast %438 : vector<8x1xf32> to vector<8x128xf32>
    %519 = arith.minimumf %518, %517 : vector<8x128xf32>
    %c0_122 = arith.constant 0 : index
    %c32_123 = arith.constant 32 : index
    %c0_124 = arith.constant 0 : index
    %520 = vector.load %arg3[%c0_122, %c32_123, %c0_124] : memref<4x40x128xf32, #tpu.memory_space<vmem>>, vector<1x8x128xf32>
    %521 = vector.shape_cast %520 : vector<1x8x128xf32> to vector<8x128xf32>
    %522 = vector.shape_cast %498 : vector<8x128xf32> to vector<1x8x128xf32>
    tpu.vector_store %arg3[%c0_122, %c32_123, %c0_124], %522 {strides = array<i32>} : memref<4x40x128xf32, #tpu.memory_space<vmem>>, vector<1x8x128xf32>,
    %c1_125 = arith.constant 1 : index
    %c32_126 = arith.constant 32 : index
    %c0_127 = arith.constant 0 : index
    %523 = vector.load %arg3[%c1_125, %c32_126, %c0_127] : memref<4x40x128xf32, #tpu.memory_space<vmem>>, vector<1x8x128xf32>
    %524 = vector.shape_cast %523 : vector<1x8x128xf32> to vector<8x128xf32>
    %525 = vector.shape_cast %505 : vector<8x128xf32> to vector<1x8x128xf32>
    tpu.vector_store %arg3[%c1_125, %c32_126, %c0_127], %525 {strides = array<i32>} : memref<4x40x128xf32, #tpu.memory_space<vmem>>, vector<1x8x128xf32>,
    %c2_128 = arith.constant 2 : index
    %c32_129 = arith.constant 32 : index
    %c0_130 = arith.constant 0 : index
    %526 = vector.load %arg3[%c2_128, %c32_129, %c0_130] : memref<4x40x128xf32, #tpu.memory_space<vmem>>, vector<1x8x128xf32>
    %527 = vector.shape_cast %526 : vector<1x8x128xf32> to vector<8x128xf32>
    %528 = vector.shape_cast %512 : vector<8x128xf32> to vector<1x8x128xf32>
    tpu.vector_store %arg3[%c2_128, %c32_129, %c0_130], %528 {strides = array<i32>} : memref<4x40x128xf32, #tpu.memory_space<vmem>>, vector<1x8x128xf32>,
    %c3_131 = arith.constant 3 : index
    %c32_132 = arith.constant 32 : index
    %c0_133 = arith.constant 0 : index
    %529 = vector.load %arg3[%c3_131, %c32_132, %c0_133] : memref<4x40x128xf32, #tpu.memory_space<vmem>>, vector<1x8x128xf32>
    %530 = vector.shape_cast %529 : vector<1x8x128xf32> to vector<8x128xf32>
    %531 = vector.shape_cast %519 : vector<8x128xf32> to vector<1x8x128xf32>
    tpu.vector_store %arg3[%c3_131, %c32_132, %c0_133], %531 {strides = array<i32>} : memref<4x40x128xf32, #tpu.memory_space<vmem>>, vector<1x8x128xf32>,
    %532 = arith.extui %460 : vector<8x128xi1> to vector<8x128xi32>
    %533 = arith.sitofp %532 : vector<8x128xi32> to vector<8x128xf32>
    %c32_134 = arith.constant 32 : index
    %c0_135 = arith.constant 0 : index
    %534 = vector.load %arg4[%c32_134, %c0_135] : memref<40x128xf32, #tpu.memory_space<vmem>>, vector<8x128xf32>
    tpu.vector_store %arg4[%c32_134, %c0_135], %533 {strides = array<i32>} : memref<40x128xf32, #tpu.memory_space<vmem>>, vector<8x128xf32>,
    %c32_136 = arith.constant 32 : index
    %c0_137 = arith.constant 0 : index
    %535 = vector.load %arg5[%c32_136, %c0_137] : memref<40x128xf32, #tpu.memory_space<vmem>>, vector<8x128xf32>
    tpu.vector_store %arg5[%c32_136, %c0_137], %491 {strides = array<i32>} : memref<40x128xf32, #tpu.memory_space<vmem>>, vector<8x128xf32>,
    return
  }
  func.func @transform_0(%arg0: i32) -> (i32, i32) {
    %c0_i32 = arith.constant 0 : i32
    %c0_i32_0 = arith.constant 0 : i32
    %c0_i32_1 = arith.constant 0 : i32
    return %c0_i32, %c0_i32_0 : i32, i32
  }
  func.func @transform_1(%arg0: i32) -> (i32, i32) {
    %c0_i32 = arith.constant 0 : i32
    %c0_i32_0 = arith.constant 0 : i32
    %c0_i32_1 = arith.constant 0 : i32
    return %c0_i32, %c0_i32_0 : i32, i32
  }
  func.func @transform_2(%arg0: i32) -> (i32, i32, i32) {
    %c0_i32 = arith.constant 0 : i32
    %c0_i32_0 = arith.constant 0 : i32
    %c0_i32_1 = arith.constant 0 : i32
    %c0_i32_2 = arith.constant 0 : i32
    return %c0_i32, %c0_i32_0, %c0_i32_1 : i32, i32, i32
  }
  func.func @transform_3(%arg0: i32) -> (i32, i32) {
    %c0_i32 = arith.constant 0 : i32
    %c0_i32_0 = arith.constant 0 : i32
    %c0_i32_1 = arith.constant 0 : i32
    return %c0_i32, %c0_i32_0 : i32, i32
  }
  func.func @transform_4(%arg0: i32) -> (i32, i32) {
    %c0_i32 = arith.constant 0 : i32
    %c0_i32_0 = arith.constant 0 : i32
    %c0_i32_1 = arith.constant 0 : i32
    return %c0_i32, %c0_i32_0 : i32, i32
  }
}

</mosaic_0001>

<llo_original>
// kernel: tpu_custom_call.1
$region0: #{tpu_custom_call.1}
  #allocation0 [shape = 'u32[]', space=smem, size = 0x4, offset = 0x4, fixed_abs, tag = 'smem constant byte address 0x4 - core index']
  #allocation1 [shape = 'u32[144,128]{1,0:T(1,128)}', space=vmem, size = 0x12000, scoped, tag = 'internal scratch']
  %s0 = inlined_call_operand.vmem [shape: f32[40,8], index: 0, kind: input, shape index: {}]
  %s1 = inlined_call_operand.vmem [shape: f32[8,128], index: 1, kind: input, shape index: {}]
  %s2 = inlined_call_operand.hbm [shape: f32[4,40,128], index: 2, kind: output, shape index: {0}]
  %s3 = inlined_call_operand.hbm [shape: f32[40,128], index: 3, kind: output, shape index: {1}]
  %s4 = inlined_call_operand.hbm [shape: f32[40,128], index: 4, kind: output, shape index: {2}]
  %5 = xla_tuple %s2, %s3, %s4
  %s6 = sld [smem:[#allocation0]]
  $region34: #{tpu_custom_call.1} parent=0
    _
  %s8 = ssub.s32 1, %s6
  %s9 = scalar_select 0, %s8, %s6
  $region1: #{tpu_custom_call.1} parent=0
    #allocation2 [shape = 'u8[81920]{0}', space=vmem, size = 0x14000, scoped, tag = 'output window, operand 0, single buffered']
    #allocation3 [shape = 's32[1]{0}', space=sflag, size = 0x4, scoped, tag = 'scoped memory for tpu_custom_call.1']
    #allocation4 [shape = 'u8[20480]{0}', space=vmem, size = 0x5000, scoped, tag = 'output window, operand 1, single buffered']
    #allocation5 [shape = 's32[1]{0}', space=sflag, size = 0x4, scoped, tag = 'scoped memory for tpu_custom_call.1']
    #allocation6 [shape = 'u8[20480]{0}', space=vmem, size = 0x5000, scoped, tag = 'output window, operand 2, single buffered']
    %10 = vsyncpa [#allocation3], 0
    %11 = vsyncpa [#allocation5], 0
    // Predicated region
    $region2: #{tpu_custom_call.1} parent=1 // pred_check
      _
    $region3: #{tpu_custom_call.1} parent=1 // pred_check_branch
      %13 = sbr.rel (0) target = $region5
    $region4: #{tpu_custom_call.1} parent=1 // pred_region
      _
    $region5: #{tpu_custom_call.1} parent=1 // pred_fallthru
      _
    // Predicated region
    $region6: #{tpu_custom_call.1} parent=1 // pred_check
      _
    $region7: #{tpu_custom_call.1} parent=1 // pred_check_branch
      %15 = sbr.rel (0) target = $region9
    $region8: #{tpu_custom_call.1} parent=1 // pred_region
      _
    $region9: #{tpu_custom_call.1} parent=1 // pred_fallthru
      _
    %v16 = vld [vmem:[%s1] sm:$0x1]
    %v17 = vld [vmem:[%s1 + $0x1] sm:$0x1]
    %v18 = vld [vmem:[%s1 + $0x2] sm:$0x1]
    %v19 = vld [vmem:[%s1 + $0x3] sm:$0x1]
    %v20 = vld [vmem:[%s1 + $0x4] sm:$0x1]
    %vm21 = vcmp.gt.f32.partialorder %v20, 0.5
    %v22 = vadd.f32 %v16, %v18
    %v23 = vmul.f32 %v22, 0.5
    %v24 = vadd.f32 %v17, %v19
    %v25 = vmul.f32 %v24, 0.5
    %v26 = vsub.f32 %v18, %v16
    %v27 = vsub.f32 %v19, %v17
    %v28 = vmul.f32 %v26, %v27
    %v29 = vld [vmem:[%s0] sm:$0xff]
    %vm30 = vcmp.gt.f32.partialorder %v29, 0.5
    %32 = vset.pattern.permute.xlu0 0
    %33 = vperm.xlu0 %32, %v29
    %v34 = vpop.permute.xlu0 %33
    %v36 = vlaneseq
    %v37 = vshrl.u32 %v36, 7
    %v38 = vsub.s32 0, %v37
    %v39 = vrot.slane %v23, %v38
    %vm40 = vcmp.lt.f32.partialorder %v34, %v39
    %41 = vset.pattern.permute.xlu0 2
    %42 = vperm.xlu0 %41, %v29
    %v43 = vpop.permute.xlu0 %42
    %vm45 = vcmp.lt.f32.partialorder %v39, %v43
    %vm46 = vmand %vm40, %vm45
    %47 = vset.pattern.permute.xlu0 1
    %48 = vperm.xlu0 %47, %v29
    %v49 = vpop.permute.xlu0 %48
    %v51 = vlaneseq
    %v52 = vshrl.u32 %v51, 7
    %v53 = vsub.s32 0, %v52
    %v54 = vrot.slane %v25, %v53
    %vm55 = vcmp.lt.f32.partialorder %v49, %v54
    %vm56 = vmand %vm46, %vm55
    %57 = vset.pattern.permute.xlu0 3
    %58 = vperm.xlu0 %57, %v29
    %v59 = vpop.permute.xlu0 %58
    %vm61 = vcmp.lt.f32.partialorder %v54, %v59
    %vm62 = vmand %vm56, %vm61
    %v63 = vsel %vm21, 1, 0
    %v64 = vlaneseq
    %v65 = vshrl.u32 %v64, 7
    %v66 = vsub.s32 0, %v65
    %v67 = vrot.slane %v63, %v66
    %vm68 = vcmp.eq.s32.totalorder %v67, 1
    %vm69 = vmand %vm62, %vm68
    %v70 = vsel %vm30, 1, 0
    %71 = vset.pattern.permute.xlu0 6
    %72 = vperm.xlu0 %71, %v70
    %v73 = vpop.permute.xlu0 %72
    %vm74 = vcmp.eq.s32.totalorder %v73, 1
    %vm75 = vmand %vm69, %vm74
    %v76 = vlaneseq
    %v77 = vshrl.u32 %v76, 7
    %v78 = vsub.s32 0, %v77
    %v79 = vrot.slane %v16, %v78
    %v80 = vmax.f32 %v79, %v34
    %v81 = vlaneseq
    %v82 = vshrl.u32 %v81, 7
    %v83 = vsub.s32 0, %v82
    %v84 = vrot.slane %v17, %v83
    %v85 = vmax.f32 %v84, %v49
    %v86 = vlaneseq
    %v87 = vshrl.u32 %v86, 7
    %v88 = vsub.s32 0, %v87
    %v89 = vrot.slane %v18, %v88
    %v90 = vmin.f32 %v89, %v43
    %v91 = vlaneseq
    %v92 = vshrl.u32 %v91, 7
    %v93 = vsub.s32 0, %v92
    %v94 = vrot.slane %v19, %v93
    %v95 = vmin.f32 %v94, %v59
    %v96 = vsub.f32 %v90, %v80
    %v97 = vmax.f32 %v96, 0.0
    %v98 = vsub.f32 %v95, %v85
    %v99 = vmax.f32 %v98, 0.0
    %v100 = vmul.f32 %v97, %v99
    %101 = vrot.lane.b32.xlu0 %v29, 2
    %v102 = vpop.permute.xlu0 %101
    %v104 = vsub.f32 %v29, %v102
    %106 = vrot.lane.b32.xlu0 %v104, 127
    %v107 = vpop.permute.xlu0 %106
    %v109 = vmul.f32 %v104, %v107
    %v110 = vlaneseq
    %v111 = vshrl.u32 %v110, 7
    %v112 = vsub.s32 0, %v111
    %v113 = vrot.slane %v28, %v112
    %115 = vset.pattern.permute.xlu0 2
    %116 = vperm.xlu0 %115, %v109
    %v117 = vpop.permute.xlu0 %116
    %v119 = vadd.f32 %v113, %v117
    %v120 = vsub.f32 %v119, %v100
    %v121 = vmax.f32 %v120, 1e-06
    %v122 = vrcp.pop %v121
    %v123 = vmul.f32 %v100, %v122
    %v124 = vsel %vm75, %v123, -1.0
    %v125 = vsub.f32 %v79, %v34
    %v126 = vmax.f32 %v125, 0.0
    %127 = vset.pattern.permute.xlu0 4
    %128 = vperm.xlu0 %127, %v29
    %v129 = vpop.permute.xlu0 %128
    %v131 = vmin.f32 %v129, %v126
    %v132 = vsub.f32 %v84, %v49
    %v133 = vmax.f32 %v132, 0.0
    %134 = vset.pattern.permute.xlu0 5
    %135 = vperm.xlu0 %134, %v29
    %v136 = vpop.permute.xlu0 %135
    %v138 = vmin.f32 %v136, %v133
    %v139 = vsub.f32 %v89, %v34
    %v140 = vmax.f32 %v139, 0.0
    %v141 = vmin.f32 %v129, %v140
    %v142 = vsub.f32 %v94, %v49
    %v143 = vmax.f32 %v142, 0.0
    %v144 = vmin.f32 %v136, %v143
    %145 = vst [vmem:[#allocation2] sm:$0xff] %v131
    %s146 = scalar_lea.vmem [#allocation2], 40
    %147 = vst [vmem:[%s146] sm:$0xff] %v138
    %s148 = scalar_lea.vmem [#allocation2], 80
    %149 = vst [vmem:[%s148] sm:$0xff] %v141
    %s150 = scalar_lea.vmem [#allocation2], 120
    %151 = vst [vmem:[%s150] sm:$0xff] %v144
    %v152 = vsel %vm75, 1, 0
    %v153 = vcvt.s32.f32 %v152
    %154 = vst [vmem:[#allocation4] sm:$0xff] %v153
    %155 = vst [vmem:[#allocation6] sm:$0xff] %v124
    %v156 = vld [vmem:[%s0 + $0x8] sm:$0xff]
    %vm157 = vcmp.gt.f32.partialorder %v156, 0.5
    %159 = vset.pattern.permute.xlu0 0
    %160 = vperm.xlu0 %159, %v156
    %v161 = vpop.permute.xlu0 %160
    %vm163 = vcmp.lt.f32.partialorder %v161, %v39
    %164 = vset.pattern.permute.xlu0 2
    %165 = vperm.xlu0 %164, %v156
    %v166 = vpop.permute.xlu0 %165
    %vm168 = vcmp.lt.f32.partialorder %v39, %v166
    %vm169 = vmand %vm163, %vm168
    %170 = vset.pattern.permute.xlu0 1
    %171 = vperm.xlu0 %170, %v156
    %v172 = vpop.permute.xlu0 %171
    %vm174 = vcmp.lt.f32.partialorder %v172, %v54
    %vm175 = vmand %vm169, %vm174
    %176 = vset.pattern.permute.xlu0 3
    %177 = vperm.xlu0 %176, %v156
    %v178 = vpop.permute.xlu0 %177
    %vm180 = vcmp.lt.f32.partialorder %v54, %v178
    %vm181 = vmand %vm175, %vm180
    %vm182 = vmand %vm181, %vm68
    %v183 = vsel %vm157, 1, 0
    %184 = vset.pattern.permute.xlu0 6
    %185 = vperm.xlu0 %184, %v183
    %v186 = vpop.permute.xlu0 %185
    %vm187 = vcmp.eq.s32.totalorder %v186, 1
    %vm188 = vmand %vm182, %vm187
    %v189 = vmax.f32 %v79, %v161
    %v190 = vmax.f32 %v84, %v172
    %v191 = vmin.f32 %v89, %v166
    %v192 = vmin.f32 %v94, %v178
    %v193 = vsub.f32 %v191, %v189
    %v194 = vmax.f32 %v193, 0.0
    %v195 = vsub.f32 %v192, %v190
    %v196 = vmax.f32 %v195, 0.0
    %v197 = vmul.f32 %v194, %v196
    %198 = vrot.lane.b32.xlu0 %v156, 2
    %v199 = vpop.permute.xlu0 %198
    %v201 = vsub.f32 %v156, %v199
    %203 = vrot.lane.b32.xlu0 %v201, 127
    %v204 = vpop.permute.xlu0 %203
    %v206 = vmul.f32 %v201, %v204
    %208 = vset.pattern.permute.xlu0 2
    %209 = vperm.xlu0 %208, %v206
    %v210 = vpop.permute.xlu0 %209
    %v212 = vadd.f32 %v113, %v210
    %v213 = vsub.f32 %v212, %v197
    %v214 = vmax.f32 %v213, 1e-06
    %v215 = vrcp.pop %v214
    %v216 = vmul.f32 %v197, %v215
    %v217 = vsel %vm188, %v216, -1.0
    %v218 = vsub.f32 %v79, %v161
    %v219 = vmax.f32 %v218, 0.0
    %220 = vset.pattern.permute.xlu0 4
    %221 = vperm.xlu0 %220, %v156
    %v222 = vpop.permute.xlu0 %221
    %v224 = vmin.f32 %v222, %v219
    %v225 = vsub.f32 %v84, %v172
    %v226 = vmax.f32 %v225, 0.0
    %227 = vset.pattern.permute.xlu0 5
    %228 = vperm.xlu0 %227, %v156
    %v229 = vpop.permute.xlu0 %228
    %v231 = vmin.f32 %v229, %v226
    %v232 = vsub.f32 %v89, %v161
    %v233 = vmax.f32 %v232, 0.0
    %v234 = vmin.f32 %v222, %v233
    %v235 = vsub.f32 %v94, %v172
    %v236 = vmax.f32 %v235, 0.0
    %v237 = vmin.f32 %v229, %v236
    %238 = vst [vmem:[#allocation2 + $0x8] sm:$0xff] %v224
    %239 = vst [vmem:[%s146 + $0x8] sm:$0xff] %v231
    %240 = vst [vmem:[%s148 + $0x8] sm:$0xff] %v234
    %241 = vst [vmem:[%s150 + $0x8] sm:$0xff] %v237
    %v242 = vsel %vm188, 1, 0
    %v243 = vcvt.s32.f32 %v242
    %244 = vst [vmem:[#allocation4 + $0x8] sm:$0xff] %v243
    %245 = vst [vmem:[#allocation6 + $0x8] sm:$0xff] %v217
    %v246 = vld [vmem:[%s0 + $0x10] sm:$0xff]
    %vm247 = vcmp.gt.f32.partialorder %v246, 0.5
    %249 = vset.pattern.permute.xlu0 0
    %250 = vperm.xlu0 %249, %v246
    %v251 = vpop.permute.xlu0 %250
    %vm253 = vcmp.lt.f32.partialorder %v251, %v39
    %254 = vset.pattern.permute.xlu0 2
    %255 = vperm.xlu0 %254, %v246
    %v256 = vpop.permute.xlu0 %255
    %vm258 = vcmp.lt.f32.partialorder %v39, %v256
    %vm259 = vmand %vm253, %vm258
    %260 = vset.pattern.permute.xlu0 1
    %261 = vperm.xlu0 %260, %v246
    %v262 = vpop.permute.xlu0 %261
    %vm264 = vcmp.lt.f32.partialorder %v262, %v54
    %vm265 = vmand %vm259, %vm264
    %266 = vset.pattern.permute.xlu0 3
    %267 = vperm.xlu0 %266, %v246
    %v268 = vpop.permute.xlu0 %267
    %vm270 = vcmp.lt.f32.partialorder %v54, %v268
    %vm271 = vmand %vm265, %vm270
    %vm272 = vmand %vm271, %vm68
    %v273 = vsel %vm247, 1, 0
    %274 = vset.pattern.permute.xlu0 6
    %275 = vperm.xlu0 %274, %v273
    %v276 = vpop.permute.xlu0 %275
    %vm277 = vcmp.eq.s32.totalorder %v276, 1
    %vm278 = vmand %vm272, %vm277
    %v279 = vmax.f32 %v79, %v251
    %v280 = vmax.f32 %v84, %v262
    %v281 = vmin.f32 %v89, %v256
    %v282 = vmin.f32 %v94, %v268
    %v283 = vsub.f32 %v281, %v279
    %v284 = vmax.f32 %v283, 0.0
    %v285 = vsub.f32 %v282, %v280
    %v286 = vmax.f32 %v285, 0.0
    %v287 = vmul.f32 %v284, %v286
    %288 = vrot.lane.b32.xlu0 %v246, 2
    %v289 = vpop.permute.xlu0 %288
    %v291 = vsub.f32 %v246, %v289
    %293 = vrot.lane.b32.xlu0 %v291, 127
    %v294 = vpop.permute.xlu0 %293
    %v296 = vmul.f32 %v291, %v294
    %298 = vset.pattern.permute.xlu0 2
    %299 = vperm.xlu0 %298, %v296
    %v300 = vpop.permute.xlu0 %299
    %v302 = vadd.f32 %v113, %v300
    %v303 = vsub.f32 %v302, %v287
    %v304 = vmax.f32 %v303, 1e-06
    %v305 = vrcp.pop %v304
    %v306 = vmul.f32 %v287, %v305
    %v307 = vsel %vm278, %v306, -1.0
    %v308 = vsub.f32 %v79, %v251
    %v309 = vmax.f32 %v308, 0.0
    %310 = vset.pattern.permute.xlu0 4
    %311 = vperm.xlu0 %310, %v246
    %v312 = vpop.permute.xlu0 %311
    %v314 = vmin.f32 %v312, %v309
    %v315 = vsub.f32 %v84, %v262
    %v316 = vmax.f32 %v315, 0.0
    %317 = vset.pattern.permute.xlu0 5
    %318 = vperm.xlu0 %317, %v246
    %v319 = vpop.permute.xlu0 %318
    %v321 = vmin.f32 %v319, %v316
    %v322 = vsub.f32 %v89, %v251
    %v323 = vmax.f32 %v322, 0.0
    %v324 = vmin.f32 %v312, %v323
    %v325 = vsub.f32 %v94, %v262
    %v326 = vmax.f32 %v325, 0.0
    %v327 = vmin.f32 %v319, %v326
    %328 = vst [vmem:[#allocation2 + $0x10] sm:$0xff] %v314
    %329 = vst [vmem:[%s146 + $0x10] sm:$0xff] %v321
    %330 = vst [vmem:[%s148 + $0x10] sm:$0xff] %v324
    %331 = vst [vmem:[%s150 + $0x10] sm:$0xff] %v327
    %v332 = vsel %vm278, 1, 0
    %v333 = vcvt.s32.f32 %v332
    %334 = vst [vmem:[#allocation4 + $0x10] sm:$0xff] %v333
    %335 = vst [vmem:[#allocation6 + $0x10] sm:$0xff] %v307
    %v336 = vld [vmem:[%s0 + $0x18] sm:$0xff]
    %vm337 = vcmp.gt.f32.partialorder %v336, 0.5
    %339 = vset.pattern.permute.xlu0 0
    %340 = vperm.xlu0 %339, %v336
    %v341 = vpop.permute.xlu0 %340
    %vm343 = vcmp.lt.f32.partialorder %v341, %v39
    %344 = vset.pattern.permute.xlu0 2
    %345 = vperm.xlu0 %344, %v336
    %v346 = vpop.permute.xlu0 %345
    %vm348 = vcmp.lt.f32.partialorder %v39, %v346
    %vm349 = vmand %vm343, %vm348
    %350 = vset.pattern.permute.xlu0 1
    %351 = vperm.xlu0 %350, %v336
    %v352 = vpop.permute.xlu0 %351
    %vm354 = vcmp.lt.f32.partialorder %v352, %v54
    %vm355 = vmand %vm349, %vm354
    %356 = vset.pattern.permute.xlu0 3
    %357 = vperm.xlu0 %356, %v336
    %v358 = vpop.permute.xlu0 %357
    %vm360 = vcmp.lt.f32.partialorder %v54, %v358
    %vm361 = vmand %vm355, %vm360
    %vm362 = vmand %vm361, %vm68
    %v363 = vsel %vm337, 1, 0
    %364 = vset.pattern.permute.xlu0 6
    %365 = vperm.xlu0 %364, %v363
    %v366 = vpop.permute.xlu0 %365
    %vm367 = vcmp.eq.s32.totalorder %v366, 1
    %vm368 = vmand %vm362, %vm367
    %v369 = vmax.f32 %v79, %v341
    %v370 = vmax.f32 %v84, %v352
    %v371 = vmin.f32 %v89, %v346
    %v372 = vmin.f32 %v94, %v358
    %v373 = vsub.f32 %v371, %v369
    %v374 = vmax.f32 %v373, 0.0
    %v375 = vsub.f32 %v372, %v370
    %v376 = vmax.f32 %v375, 0.0
    %v377 = vmul.f32 %v374, %v376
    %378 = vrot.lane.b32.xlu0 %v336, 2
    %v379 = vpop.permute.xlu0 %378
    %v381 = vsub.f32 %v336, %v379
    %383 = vrot.lane.b32.xlu0 %v381, 127
    %v384 = vpop.permute.xlu0 %383
    %v386 = vmul.f32 %v381, %v384
    %388 = vset.pattern.permute.xlu0 2
    %389 = vperm.xlu0 %388, %v386
    %v390 = vpop.permute.xlu0 %389
    %v392 = vadd.f32 %v113, %v390
    %v393 = vsub.f32 %v392, %v377
    %v394 = vmax.f32 %v393, 1e-06
    %v395 = vrcp.pop %v394
    %v396 = vmul.f32 %v377, %v395
    %v397 = vsel %vm368, %v396, -1.0
    %v398 = vsub.f32 %v79, %v341
    %v399 = vmax.f32 %v398, 0.0
    %400 = vset.pattern.permute.xlu0 4
    %401 = vperm.xlu0 %400, %v336
    %v402 = vpop.permute.xlu0 %401
    %v404 = vmin.f32 %v402, %v399
    %v405 = vsub.f32 %v84, %v352
    %v406 = vmax.f32 %v405, 0.0
    %407 = vset.pattern.permute.xlu0 5
    %408 = vperm.xlu0 %407, %v336
    %v409 = vpop.permute.xlu0 %408
    %v411 = vmin.f32 %v409, %v406
    %v412 = vsub.f32 %v89, %v341
    %v413 = vmax.f32 %v412, 0.0
    %v414 = vmin.f32 %v402, %v413
    %v415 = vsub.f32 %v94, %v352
    %v416 = vmax.f32 %v415, 0.0
    %v417 = vmin.f32 %v409, %v416
    %418 = vst [vmem:[#allocation2 + $0x18] sm:$0xff] %v404
    %419 = vst [vmem:[%s146 + $0x18] sm:$0xff] %v411
    %420 = vst [vmem:[%s148 + $0x18] sm:$0xff] %v414
    %421 = vst [vmem:[%s150 + $0x18] sm:$0xff] %v417
    %v422 = vsel %vm368, 1, 0
    %v423 = vcvt.s32.f32 %v422
    %424 = vst [vmem:[#allocation4 + $0x18] sm:$0xff] %v423
    %425 = vst [vmem:[#allocation6 + $0x18] sm:$0xff] %v397
    %v426 = vld [vmem:[%s0 + $0x20] sm:$0xff]
    %vm427 = vcmp.gt.f32.partialorder %v426, 0.5
    %429 = vset.pattern.permute.xlu0 0
    %430 = vperm.xlu0 %429, %v426
    %v431 = vpop.permute.xlu0 %430
    %vm433 = vcmp.lt.f32.partialorder %v431, %v39
    %434 = vset.pattern.permute.xlu0 2
    %435 = vperm.xlu0 %434, %v426
    %v436 = vpop.permute.xlu0 %435
    %vm438 = vcmp.lt.f32.partialorder %v39, %v436
    %vm439 = vmand %vm433, %vm438
    %440 = vset.pattern.permute.xlu0 1
    %441 = vperm.xlu0 %440, %v426
    %v442 = vpop.permute.xlu0 %441
    %vm444 = vcmp.lt.f32.partialorder %v442, %v54
    %vm445 = vmand %vm439, %vm444
    %446 = vset.pattern.permute.xlu0 3
    %447 = vperm.xlu0 %446, %v426
    %v448 = vpop.permute.xlu0 %447
    %vm450 = vcmp.lt.f32.partialorder %v54, %v448
    %vm451 = vmand %vm445, %vm450
    %vm452 = vmand %vm451, %vm68
    %v453 = vsel %vm427, 1, 0
    %454 = vset.pattern.permute.xlu0 6
    %455 = vperm.xlu0 %454, %v453
    %v456 = vpop.permute.xlu0 %455
    %vm457 = vcmp.eq.s32.totalorder %v456, 1
    %vm458 = vmand %vm452, %vm457
    %v459 = vmax.f32 %v79, %v431
    %v460 = vmax.f32 %v84, %v442
    %v461 = vmin.f32 %v89, %v436
    %v462 = vmin.f32 %v94, %v448
    %v463 = vsub.f32 %v461, %v459
    %v464 = vmax.f32 %v463, 0.0
    %v465 = vsub.f32 %v462, %v460
    %v466 = vmax.f32 %v465, 0.0
    %v467 = vmul.f32 %v464, %v466
    %468 = vrot.lane.b32.xlu0 %v426, 2
    %v469 = vpop.permute.xlu0 %468
    %v471 = vsub.f32 %v426, %v469
    %473 = vrot.lane.b32.xlu0 %v471, 127
    %v474 = vpop.permute.xlu0 %473
    %v476 = vmul.f32 %v471, %v474
    %478 = vset.pattern.permute.xlu0 2
    %479 = vperm.xlu0 %478, %v476
    %v480 = vpop.permute.xlu0 %479
    %v482 = vadd.f32 %v113, %v480
    %v483 = vsub.f32 %v482, %v467
    %v484 = vmax.f32 %v483, 1e-06
    %v485 = vrcp.pop %v484
    %v486 = vmul.f32 %v467, %v485
    %v487 = vsel %vm458, %v486, -1.0
    %v488 = vsub.f32 %v79, %v431
    %v489 = vmax.f32 %v488, 0.0
    %490 = vset.pattern.permute.xlu0 4
    %491 = vperm.xlu0 %490, %v426
    %v492 = vpop.permute.xlu0 %491
    %v494 = vmin.f32 %v492, %v489
    %v495 = vsub.f32 %v84, %v442
    %v496 = vmax.f32 %v495, 0.0
    %497 = vset.pattern.permute.xlu0 5
    %498 = vperm.xlu0 %497, %v426
    %v499 = vpop.permute.xlu0 %498
    %v501 = vmin.f32 %v499, %v496
    %v502 = vsub.f32 %v89, %v431
    %v503 = vmax.f32 %v502, 0.0
    %v504 = vmin.f32 %v492, %v503
    %v505 = vsub.f32 %v94, %v442
    %v506 = vmax.f32 %v505, 0.0
    %v507 = vmin.f32 %v499, %v506
    %508 = vst [vmem:[#allocation2 + $0x20] sm:$0xff] %v494
    %509 = vst [vmem:[%s146 + $0x20] sm:$0xff] %v501
    %510 = vst [vmem:[%s148 + $0x20] sm:$0xff] %v504
    %511 = vst [vmem:[%s150 + $0x20] sm:$0xff] %v507
    %v512 = vsel %vm458, 1, 0
    %v513 = vcvt.s32.f32 %v512
    %514 = vst [vmem:[#allocation4 + $0x20] sm:$0xff] %v513
    %515 = vst [vmem:[#allocation6 + $0x20] sm:$0xff] %v487
    // Predicated region
    $region10: #{tpu_custom_call.1} parent=1 // pred_check
      _
    $region11: #{tpu_custom_call.1} parent=1 // pred_check_branch
      %517 = sbr.rel (0) target = $region13
    $region12: #{tpu_custom_call.1} parent=1 // pred_region
      %s519 = ssub.s32 2560, 2560
      %520 = vsyncadd [#allocation3], %s519
      %s521 = sshll.u32 [#allocation2], 4
      %s522 = int_to_ptr.vmem [resolvable:$true] %s521
      %527 = dma.vmem_to_hbm [thread:$0]  %s522, 2560, %s2, [#allocation3], 128, 128, 8
    $region13: #{tpu_custom_call.1} parent=1 // pred_fallthru
      _
    // Predicated region
    $region14: #{tpu_custom_call.1} parent=1 // pred_check
      _
    $region15: #{tpu_custom_call.1} parent=1 // pred_check_branch
      %529 = sbr.rel (0) target = $region17
    $region16: #{tpu_custom_call.1} parent=1 // pred_region
      %s531 = ssub.s32 640, 640
      %532 = vsyncadd [#allocation5], %s531
      %s533 = sshll.u32 [#allocation4], 4
      %s534 = int_to_ptr.vmem [resolvable:$true] %s533
      %539 = dma.vmem_to_hbm [thread:$0]  %s534, 640, %s3, [#allocation5], 128, 128, 8
    $region17: #{tpu_custom_call.1} parent=1 // pred_fallthru
      _
    // Predicated region
    $region18: #{tpu_custom_call.1} parent=1 // pred_check
      _
    $region19: #{tpu_custom_call.1} parent=1 // pred_check_branch
      %541 = sbr.rel (0) target = $region21
    $region20: #{tpu_custom_call.1} parent=1 // pred_region
      %s543 = ssub.s32 640, 640
      %544 = vsyncadd [#allocation5], %s543
      %s545 = sshll.u32 [#allocation6], 4
      %s546 = int_to_ptr.vmem [resolvable:$true] %s545
      %551 = dma.vmem_to_hbm [thread:$0]  %s546, 640, %s4, [#allocation5], 128, 128, 8
    $region21: #{tpu_custom_call.1} parent=1 // pred_fallthru
      _
    // Predicated region
    $region22: #{tpu_custom_call.1} parent=1 // pred_check
      _
    $region23: #{tpu_custom_call.1} parent=1 // pred_check_branch
      %553 = sbr.rel (0) target = $region25
    $region24: #{tpu_custom_call.1} parent=1 // pred_region
      %554 = dma.done [#allocation3], 2560
    $region25: #{tpu_custom_call.1} parent=1 // pred_fallthru
      _
    // Predicated region
    $region26: #{tpu_custom_call.1} parent=1 // pred_check
      _
    $region27: #{tpu_custom_call.1} parent=1 // pred_check_branch
      %556 = sbr.rel (0) target = $region29
    $region28: #{tpu_custom_call.1} parent=1 // pred_region
      %557 = dma.done [#allocation5], 640
    $region29: #{tpu_custom_call.1} parent=1 // pred_fallthru
      _
    // Predicated region
    $region30: #{tpu_custom_call.1} parent=1 // pred_check
      _
    $region31: #{tpu_custom_call.1} parent=1 // pred_check_branch
      %559 = sbr.rel (0) target = $region33
    $region32: #{tpu_custom_call.1} parent=1 // pred_region
      %560 = dma.done [#allocation5], 640
    $region33: #{tpu_custom_call.1} parent=1 // pred_fallthru
      _
    %561 = vsyncpa [#allocation3], 1
    %562 = vsyncpa [#allocation5], 1

</llo_original>
